<compile_context>
chip_gen: v7x
topology: tpu7x:2x2x1
jax: 0.10.0
libtpu: 0.0.40
codegen_flags: <defaults>
</compile_context>

<pallas_src>
import functools

import jax
import jax.numpy as jnp
from jax.experimental import pallas as pl
from jax.experimental.pallas import tpu as pltpu

TEMP = 50.0
GAMMA = 0.75
LOSS_WEIGHT = 0.1
EPS = 1e-8
IGNORE_INDEX = -100  # F.cross_entropy default (forward does not override it)


def _round_up(x, m):
    return ((x + m - 1) // m) * m


# ----------------------------- contrastive kernel -----------------------------
def _contrastive_kernel(f1_ref, f2_ref, negf_ref, lab1_ref, neglab_ref, mask_ref,
                        out_ref, neg_acc, *, n_total, tn):
    nt = pl.program_id(2)

    @pl.when(nt == 0)
    def _():
        neg_acc[...] = jnp.zeros_like(neg_acc)

    f1 = f1_ref[0]                                   # [tp, Cf] f32 (resident)
    negf = negf_ref[0]                               # [Cf, tn] f32 (streamed)
    # neg_scores = feats1.T @ neg_feats / (5 * temp); bf16 MXU inputs, f32 accumulate.
    scores = jnp.dot(f1.astype(jnp.bfloat16), negf.astype(jnp.bfloat16),
                     preferred_element_type=jnp.float32) / (5.0 * TEMP)
    # neg_mask = (pseudo_labels1.T != neg_pseudo_labels), AND validity for padded cols.
    col = nt * tn + jax.lax.broadcasted_iota(jnp.int32, (1, tn), 1)    # [1, tn]
    valid = col < n_total
    neg_mask = jnp.logical_and(lab1_ref[0] != neglab_ref[0], valid)    # [tp, tn]
    masked_exp = jnp.where(neg_mask, jnp.exp(scores), 0.0)             # [tp, tn]
    # Fold tn -> 128 lanes with static 128-aligned lane slices (VPU adds only);
    # the single cross-lane XLU reduce happens once, in the epilogue.
    part = masked_exp[:, 0:128]
    for j in range(1, tn // 128):
        part = part + masked_exp[:, j * 128:(j + 1) * 128]
    neg_acc[...] += part

    @pl.when(nt == pl.num_programs(2) - 1)
    def _():
        neg_sum = jnp.sum(neg_acc[...], axis=-1, keepdims=True)        # [tp, 1]
        # pos1 = (feats1 * feats2).sum(0) / temp
        pos1 = jnp.sum(f1 * f2_ref[0], axis=-1, keepdims=True) / TEMP  # [tp, 1]
        ep = jnp.exp(pos1)
        logits1 = ep / (ep + neg_sum + EPS)
        lossn = -jnp.log(logits1 + EPS)
        out_ref[0] = mask_ref[0] * lossn


def contrastive_pallas(feats1, feats2, neg_feats, labels1, neg_labels, mask1):
    B, P, Cf = feats1.shape
    N = neg_feats.shape[-1]

    # Tile selection: big negative tiles (amortize per-step overhead), P tiled so
    # resident blocks stay small (v7x 64 MiB VMEM) and megacore gets parallel work.
    tp = _round_up(P, 8) if P <= 512 else 256
    p_pad = _round_up(P, tp)
    tn = _round_up(N, 128) if N <= 512 else 512
    n_pad = _round_up(N, tn)

    def pad_axis(x, axis, new, value=0):
        if x.shape[axis] == new:
            return x
        widths = [(0, 0)] * x.ndim
        widths[axis] = (0, new - x.shape[axis])
        return jnp.pad(x, widths, constant_values=value)

    feats1 = pad_axis(feats1, 1, p_pad)
    feats2 = pad_axis(feats2, 1, p_pad)
    labels1 = pad_axis(labels1, 1, p_pad)
    mask1 = pad_axis(mask1, 1, p_pad)          # zero mask => padded rows contribute nothing
    neg_feats = pad_axis(neg_feats, 2, n_pad)
    neg_labels = pad_axis(neg_labels, 2, n_pad)

    kernel = functools.partial(_contrastive_kernel, n_total=N, tn=tn)
    out = pl.pallas_call(
        kernel,
        out_shape=jax.ShapeDtypeStruct((B, p_pad, 1), jnp.float32),
        grid_spec=pltpu.PrefetchScalarGridSpec(
            num_scalar_prefetch=0,
            grid=(B, p_pad // tp, n_pad // tn),
            in_specs=[
                pl.BlockSpec((1, tp, Cf), lambda b, p, n: (b, p, 0)),
                pl.BlockSpec((1, tp, Cf), lambda b, p, n: (b, p, 0)),
                pl.BlockSpec((1, Cf, tn), lambda b, p, n: (b, 0, n)),
                pl.BlockSpec((1, tp, 1), lambda b, p, n: (b, p, 0)),
                pl.BlockSpec((1, 1, tn), lambda b, p, n: (b, 0, n)),
                pl.BlockSpec((1, tp, 1), lambda b, p, n: (b, p, 0)),
            ],
            out_specs=pl.BlockSpec((1, tp, 1), lambda b, p, n: (b, p, 0)),
            scratch_shapes=[pltpu.VMEM((tp, 128), jnp.float32)],
        ),
        compiler_params=pltpu.CompilerParams(
            dimension_semantics=("parallel", "parallel", "arbitrary"),
            vmem_limit_bytes=32 * 1024 * 1024),
    )(feats1, feats2, neg_feats, labels1, neg_labels, mask1)
    return out[:, :P, 0]                        # [B, P]


# ----------------------------- cross-entropy kernel ----------------------------
def _ce_kernel(logit_ref, label_ref, out_ref):
    x = logit_ref[...].astype(jnp.float32)             # [C, T] classes on sublanes
    m = jnp.max(x, axis=0, keepdims=True)               # [1, T]
    lse = m + jnp.log(jnp.sum(jnp.exp(x - m), axis=0, keepdims=True))
    lab = label_ref[...]                                 # [1, T] int32
    cls_idx = jax.lax.broadcasted_iota(jnp.int32, x.shape, 0)
    sel = jnp.sum(jnp.where(cls_idx == lab, x, 0.0), axis=0, keepdims=True)
    loss = lse - sel
    out_ref[...] = jnp.where(lab != IGNORE_INDEX, loss, 0.0)   # lane-dense [1, T]


def cross_entropy_pallas(logits_cn, labels_1n):
    """logits_cn: [C, Npix] (pixels on lanes), labels_1n: [1, Npix] int32.
    Returns per-pixel CE [Npix] (0 where label == ignore_index)."""
    C, n_pix = logits_cn.shape
    tpix = _round_up(n_pix, 128) if n_pix <= 4096 else 4096
    n_pad = _round_up(n_pix, tpix)
    if n_pad != n_pix:
        logits_cn = jnp.pad(logits_cn, ((0, 0), (0, n_pad - n_pix)))
        labels_1n = jnp.pad(labels_1n, ((0, 0), (0, n_pad - n_pix)),
                            constant_values=IGNORE_INDEX)
    out = pl.pallas_call(
        _ce_kernel,
        out_shape=jax.ShapeDtypeStruct((1, n_pad), jnp.float32),
        grid_spec=pltpu.PrefetchScalarGridSpec(
            num_scalar_prefetch=0,
            grid=(n_pad // tpix,),
            in_specs=[
                pl.BlockSpec((C, tpix), lambda i: (0, i)),
                pl.BlockSpec((1, tpix), lambda i: (0, i)),
            ],
            out_specs=pl.BlockSpec((1, tpix), lambda i: (0, i)),
        ),
        compiler_params=pltpu.CompilerParams(
            dimension_semantics=("parallel",),
            vmem_limit_bytes=32 * 1024 * 1024),
    )(logits_cn, labels_1n)
    return out[0, :n_pix]


# ----------------------------------- glue --------------------------------------
def pixelwise_contrastive_loss(feats, pseudo_logits, cls_score, gt_semantic_seg,
                               cover_crop_box):
    """Forward pass of PixelwiseContrastiveLoss (use_sigmoid=False, use_mask=False,
    reduction='mean', class_weight=None, loss_weight=0.1)."""
    f_full1, f_full2 = feats                 # each [B, 128, H, W]
    plg1, plg2 = pseudo_logits               # each [B, C, H, W]
    B, Cf, H, W = f_full1.shape
    y0, y1, x0, x1 = cover_crop_box
    # TODO(synk): `corner_crop` is undefined upstream; a static per-batch-shared
    # crop box stands in for the per-image img_metas['cover_crop_box'] crop.
    f1c = f_full1[:, :, y0:y1, x0:x1]
    f2c = f_full2[:, :, y0:y1, x0:x1]
    pl1c = plg1[:, :, y0:y1, x0:x1]
    pl2c = plg2[:, :, y0:y1, x0:x1]
    P = (y1 - y0) * (x1 - x0)
    N = H * W

    feats1 = f1c.reshape(B, Cf, P).transpose(0, 2, 1)        # [B, P, Cf]
    feats2 = f2c.reshape(B, Cf, P).transpose(0, 2, 1)        # [B, P, Cf]
    neg_feats = f_full1.reshape(B, Cf, N)                    # [B, Cf, N]

    labels1 = jnp.argmax(pl1c, axis=1).reshape(B, P, 1).astype(jnp.int32)
    neg_labels = jnp.argmax(plg1, axis=1).reshape(B, 1, N).astype(jnp.int32)

    # Matches the reference exactly: mask1 = argmax over classes of (dir & pos)
    # (a class index used as a multiplicative weight), thresholding raw pseudo logits.
    dir_mask1 = pl1c < pl2c
    pos_mask1 = pl2c > GAMMA
    mask1 = jnp.argmax((dir_mask1 & pos_mask1).astype(jnp.float32), axis=1)  # [B, y, x]
    mask1 = mask1.reshape(B, P, 1).astype(jnp.float32)

    masked_lossn = contrastive_pallas(feats1, feats2, neg_feats,
                                      labels1, neg_labels, mask1)            # [B, P]
    per_img = masked_lossn.sum(axis=-1) / (mask1[..., 0].sum(axis=-1) + EPS)
    loss1 = per_img.sum() / B

    # loss_cls = F.cross_entropy(cls_score, gt, reduction='none').mean()
    num_cls = cls_score.shape[1]
    logits_cn = cls_score.transpose(1, 0, 2, 3).reshape(num_cls, -1)   # [C, B*H*W]
    labels_1n = gt_semantic_seg.reshape(1, -1).astype(jnp.int32)
    loss_cls = cross_entropy_pallas(logits_cn, labels_1n).mean()

    return LOSS_WEIGHT * loss1 + loss_cls


if __name__ == "__main__":
    key = jax.random.PRNGKey(0)
    B, Cf, H, W = 2, 128, 16, 16          # Cf=128 is fixed by the module's reshape(128, -1)
    num_classes = 16
    k1, k2, k3, k4, k5, k6 = jax.random.split(key, 6)

    feats_v1 = jax.random.normal(k1, (B, Cf, H, W), jnp.float32)
    feats_v2 = jax.random.normal(k2, (B, Cf, H, W), jnp.float32)
    pseudo1 = jax.random.normal(k3, (B, num_classes, H, W), jnp.float32)
    pseudo2 = jax.random.normal(k4, (B, num_classes, H, W), jnp.float32)
    cls_score = jax.random.normal(k5, (B, num_classes, H, W), jnp.float32)
    gt_seg = jax.random.randint(k6, (B, H, W), 0, num_classes, jnp.int32)
    cover_crop_box = (0, 8, 0, 16)        # overlap region -> P = 8*16 = 128 positions

    loss = pixelwise_contrastive_loss([feats_v1, feats_v2], [pseudo1, pseudo2],
                                      cls_score, gt_seg, cover_crop_box)
    jax.block_until_ready(loss)
    print("KERNEL_OK")
</pallas_src>

<mosaic_0001>
module attributes {stable_mosaic.version = 11 : i64} {
  func.func @_contrastive_kernel(%arg0: i32, %arg1: i32, %arg2: i32, %arg3: memref<1x128x128xf32, #tpu.memory_space<vmem>>, %arg4: memref<1x128x128xf32, #tpu.memory_space<vmem>>, %arg5: memref<1x128x256xf32, #tpu.memory_space<vmem>>, %arg6: memref<1x128x1xi32, #tpu.memory_space<vmem>>, %arg7: memref<1x1x256xi32, #tpu.memory_space<vmem>>, %arg8: memref<1x128x1xf32, #tpu.memory_space<vmem>>, %arg9: memref<1x128x1xf32, #tpu.memory_space<vmem>>, %arg10: memref<128x128xf32, #tpu.memory_space<vmem>>) attributes {dimension_semantics = [#tpu.dimension_semantics<parallel>, #tpu.dimension_semantics<parallel>, #tpu.dimension_semantics<arbitrary>], iteration_bounds = array<i64: 2, 1, 1>, scalar_prefetch = 0 : i64, scratch_operands = 1 : i64, tpu.core_type = #tpu.core_type<tc>, window_params = [{transform_indices = @transform_0, window_bounds = array<i64: 1, 128, 128>}, {transform_indices = @transform_1, window_bounds = array<i64: 1, 128, 128>}, {transform_indices = @transform_2, window_bounds = array<i64: 1, 128, 256>}, {transform_indices = @transform_3, window_bounds = array<i64: 1, 128, 1>}, {transform_indices = @transform_4, window_bounds = array<i64: 1, 1, 256>}, {transform_indices = @transform_5, window_bounds = array<i64: 1, 128, 1>}, {transform_indices = @transform_6, window_bounds = array<i64: 1, 128, 1>}]} {
    %c0_i32 = arith.constant 0 : i32
    %0 = arith.cmpi eq, %arg2, %c0_i32 : i32
    %1 = arith.extui %0 : i1 to i32
    %c0_i32_0 = arith.constant 0 : i32
    %2 = arith.cmpi ne, %1, %c0_i32_0 : i32
    scf.if %2 {
      %cst_21 = arith.constant 0.000000e+00 : f32
      %39 = vector.broadcast %cst_21 : f32 to vector<128x128xf32>
      %c0_22 = arith.constant 0 : index
      %c0_23 = arith.constant 0 : index
      %40 = vector.load %arg10[%c0_22, %c0_23] : memref<128x128xf32, #tpu.memory_space<vmem>>, vector<128x128xf32>
      tpu.vector_store %arg10[%c0_22, %c0_23], %39 {strides = array<i32>} : memref<128x128xf32, #tpu.memory_space<vmem>>, vector<128x128xf32>,
    } else {
    }
    %c0 = arith.constant 0 : index
    %c0_1 = arith.constant 0 : index
    %c0_2 = arith.constant 0 : index
    %3 = vector.load %arg3[%c0, %c0_1, %c0_2] : memref<1x128x128xf32, #tpu.memory_space<vmem>>, vector<1x128x128xf32>
    %4 = vector.shape_cast %3 : vector<1x128x128xf32> to vector<128x128xf32>
    %c0_3 = arith.constant 0 : index
    %c0_4 = arith.constant 0 : index
    %c0_5 = arith.constant 0 : index
    %5 = vector.load %arg5[%c0_3, %c0_4, %c0_5] : memref<1x128x256xf32, #tpu.memory_space<vmem>>, vector<1x128x256xf32>
    %6 = vector.shape_cast %5 : vector<1x128x256xf32> to vector<128x256xf32>
    %7 = arith.truncf %4 : vector<128x128xf32> to vector<128x128xbf16>
    %8 = arith.truncf %6 : vector<128x256xf32> to vector<128x256xbf16>
    %cst = arith.constant dense<0.000000e+00> : vector<128x256xf32>
    %9 = tpu.matmul %7, %8, %cst {dimension_numbers = #tpu.dot_dimension_numbers<[1], [0], [0], [1], [0, 0, 1, 1], [], []>} : vector<128x128xbf16>, vector<128x256xbf16>, vector<128x256xf32> -> vector<128x256xf32>
    %cst_6 = arith.constant 2.500000e+02 : f32
    %10 = vector.broadcast %cst_6 : f32 to vector<128x256xf32>
    %11 = arith.divf %9, %10 : vector<128x256xf32>
    %c256_i32 = arith.constant 256 : i32
    %12 = arith.muli %arg2, %c256_i32 : i32
    %13 = tpu.iota {dimensions = array<i32: 1>} : vector<1x256xi32>
    %14 = vector.broadcast %12 : i32 to vector<1x256xi32>
    %15 = arith.addi %14, %13 : vector<1x256xi32>
    %c256_i32_7 = arith.constant 256 : i32
    %16 = vector.broadcast %c256_i32_7 : i32 to vector<1x256xi32>
    %17 = arith.cmpi slt, %15, %16 : vector<1x256xi32>
    %c0_8 = arith.constant 0 : index
    %c0_9 = arith.constant 0 : index
    %c0_10 = arith.constant 0 : index
    %18 = vector.load %arg6[%c0_8, %c0_9, %c0_10] : memref<1x128x1xi32, #tpu.memory_space<vmem>>, vector<1x128x1xi32>
    %19 = vector.shape_cast %18 : vector<1x128x1xi32> to vector<128x1xi32>
    %c0_11 = arith.constant 0 : index
    %c0_12 = arith.constant 0 : index
    %c0_13 = arith.constant 0 : index
    %20 = vector.load %arg7[%c0_11, %c0_12, %c0_13] : memref<1x1x256xi32, #tpu.memory_space<vmem>>, vector<1x1x256xi32>
    %21 = vector.shape_cast %20 : vector<1x1x256xi32> to vector<1x256xi32>
    %22 = vector.broadcast %19 : vector<128x1xi32> to vector<128x256xi32>
    %23 = vector.broadcast %21 : vector<1x256xi32> to vector<128x256xi32>
    %24 = arith.cmpi ne, %22, %23 : vector<128x256xi32>
    %25 = vector.broadcast %17 : vector<1x256xi1> to vector<128x256xi1>
    %26 = arith.andi %24, %25 : vector<128x256xi1>
    %27 = math.exp %11 : vector<128x256xf32>
    %cst_14 = arith.constant 0.000000e+00 : f32
    %28 = vector.broadcast %cst_14 : f32 to vector<128x256xf32>
    %29 = arith.select %26, %27, %28 : vector<128x256xi1>, vector<128x256xf32>
    %30 = vector.extract_strided_slice %29 {offsets = [0, 0], sizes = [128, 128], strides = [1, 1]} : vector<128x256xf32> to vector<128x128xf32>
    %31 = vector.extract_strided_slice %29 {offsets = [0, 128], sizes = [128, 128], strides = [1, 1]} : vector<128x256xf32> to vector<128x128xf32>
    %32 = arith.addf %30, %31 : vector<128x128xf32>
    %c0_15 = arith.constant 0 : index
    %c0_16 = arith.constant 0 : index
    %33 = vector.load %arg10[%c0_15, %c0_16] : memref<128x128xf32, #tpu.memory_space<vmem>>, vector<128x128xf32>
    %34 = arith.addf %33, %32 : vector<128x128xf32>
    %c0_17 = arith.constant 0 : index
    %c0_18 = arith.constant 0 : index
    %35 = vector.load %arg10[%c0_17, %c0_18] : memref<128x128xf32, #tpu.memory_space<vmem>>, vector<128x128xf32>
    tpu.vector_store %arg10[%c0_17, %c0_18], %34 {strides = array<i32>} : memref<128x128xf32, #tpu.memory_space<vmem>>, vector<128x128xf32>,
    %c0_i32_19 = arith.constant 0 : i32
    %36 = arith.cmpi eq, %arg2, %c0_i32_19 : i32
    %37 = arith.extui %36 : i1 to i32
    %c0_i32_20 = arith.constant 0 : i32
    %38 = arith.cmpi ne, %37, %c0_i32_20 : i32
    scf.if %38 {
      %c0_21 = arith.constant 0 : index
      %c0_22 = arith.constant 0 : index
      %39 = vector.load %arg10[%c0_21, %c0_22] : memref<128x128xf32, #tpu.memory_space<vmem>>, vector<128x128xf32>
      %cst_23 = arith.constant dense<0.000000e+00> : vector<128xf32>
      %40 = vector.multi_reduction <add>, %39, %cst_23 [1] : vector<128x128xf32> to vector<128xf32>
      %41 = vector.shape_cast %40 : vector<128xf32> to vector<128x1xf32>
      %c0_24 = arith.constant 0 : index
      %c0_25 = arith.constant 0 : index
      %c0_26 = arith.constant 0 : index
      %42 = vector.load %arg4[%c0_24, %c0_25, %c0_26] : memref<1x128x128xf32, #tpu.memory_space<vmem>>, vector<1x128x128xf32>
      %43 = vector.shape_cast %42 : vector<1x128x128xf32> to vector<128x128xf32>
      %44 = arith.mulf %4, %43 : vector<128x128xf32>
      %cst_27 = arith.constant dense<0.000000e+00> : vector<128xf32>
      %45 = vector.multi_reduction <add>, %44, %cst_27 [1] : vector<128x128xf32> to vector<128xf32>
      %46 = vector.shape_cast %45 : vector<128xf32> to vector<128x1xf32>
      %cst_28 = arith.constant 5.000000e+01 : f32
      %47 = vector.broadcast %cst_28 : f32 to vector<128x1xf32>
      %48 = arith.divf %46, %47 : vector<128x1xf32>
      %49 = math.exp %48 : vector<128x1xf32>
      %50 = arith.addf %49, %41 : vector<128x1xf32>
      %cst_29 = arith.constant 9.99999993E-9 : f32
      %51 = vector.broadcast %cst_29 : f32 to vector<128x1xf32>
      %52 = arith.addf %50, %51 : vector<128x1xf32>
      %53 = arith.divf %49, %52 : vector<128x1xf32>
      %cst_30 = arith.constant 9.99999993E-9 : f32
      %54 = vector.broadcast %cst_30 : f32 to vector<128x1xf32>
      %55 = arith.addf %53, %54 : vector<128x1xf32>
      %56 = math.log %55 : vector<128x1xf32>
      %cst_31 = arith.constant 0.000000e+00 : f32
      %57 = vector.broadcast %cst_31 : f32 to vector<128x1xf32>
      %58 = arith.subf %57, %56 : vector<128x1xf32>
      %c0_32 = arith.constant 0 : index
      %c0_33 = arith.constant 0 : index
      %c0_34 = arith.constant 0 : index
      %59 = vector.load %arg8[%c0_32, %c0_33, %c0_34] : memref<1x128x1xf32, #tpu.memory_space<vmem>>, vector<1x128x1xf32>
      %60 = vector.shape_cast %59 : vector<1x128x1xf32> to vector<128x1xf32>
      %61 = arith.mulf %60, %58 : vector<128x1xf32>
      %c0_35 = arith.constant 0 : index
      %c0_36 = arith.constant 0 : index
      %c0_37 = arith.constant 0 : index
      %62 = vector.load %arg9[%c0_35, %c0_36, %c0_37] : memref<1x128x1xf32, #tpu.memory_space<vmem>>, vector<1x128x1xf32>
      %63 = vector.shape_cast %62 : vector<1x128x1xf32> to vector<128x1xf32>
      %64 = vector.shape_cast %61 : vector<128x1xf32> to vector<1x128x1xf32>
      tpu.vector_store %arg9[%c0_35, %c0_36, %c0_37], %64 {strides = array<i32>} : memref<1x128x1xf32, #tpu.memory_space<vmem>>, vector<1x128x1xf32>,
    } else {
    }
    return
  }
  func.func @transform_0(%arg0: i32, %arg1: i32, %arg2: i32) -> (i32, i32, i32) {
    %c0_i32 = arith.constant 0 : i32
    %c0_i32_0 = arith.constant 0 : i32
    return %arg0, %arg1, %c0_i32 : i32, i32, i32
  }
  func.func @transform_1(%arg0: i32, %arg1: i32, %arg2: i32) -> (i32, i32, i32) {
    %c0_i32 = arith.constant 0 : i32
    %c0_i32_0 = arith.constant 0 : i32
    return %arg0, %arg1, %c0_i32 : i32, i32, i32
  }
  func.func @transform_2(%arg0: i32, %arg1: i32, %arg2: i32) -> (i32, i32, i32) {
    %c0_i32 = arith.constant 0 : i32
    %c0_i32_0 = arith.constant 0 : i32
    return %arg0, %c0_i32, %arg2 : i32, i32, i32
  }
  func.func @transform_3(%arg0: i32, %arg1: i32, %arg2: i32) -> (i32, i32, i32) {
    %c0_i32 = arith.constant 0 : i32
    %c0_i32_0 = arith.constant 0 : i32
    return %arg0, %arg1, %c0_i32 : i32, i32, i32
  }
  func.func @transform_4(%arg0: i32, %arg1: i32, %arg2: i32) -> (i32, i32, i32) {
    %c0_i32 = arith.constant 0 : i32
    %c0_i32_0 = arith.constant 0 : i32
    return %arg0, %c0_i32, %arg2 : i32, i32, i32
  }
  func.func @transform_5(%arg0: i32, %arg1: i32, %arg2: i32) -> (i32, i32, i32) {
    %c0_i32 = arith.constant 0 : i32
    %c0_i32_0 = arith.constant 0 : i32
    return %arg0, %arg1, %c0_i32 : i32, i32, i32
  }
  func.func @transform_6(%arg0: i32, %arg1: i32, %arg2: i32) -> (i32, i32, i32) {
    %c0_i32 = arith.constant 0 : i32
    %c0_i32_0 = arith.constant 0 : i32
    return %arg0, %arg1, %c0_i32 : i32, i32, i32
  }
}

</mosaic_0001>

<llo_original>
// kernel: tpu_custom_call.1
$region0: #{tpu_custom_call.1}
  #allocation0 [shape = 'u32[]', space=smem, size = 0x4, offset = 0x4, fixed_abs, tag = 'smem constant byte address 0x4 - core index']
  #allocation1 [shape = 'u32[144,128]{1,0:T(1,128)}', space=vmem, size = 0x12000, scoped, tag = 'internal scratch']
  #allocation2 [shape = 'f32[128,128]{1,0:T(8,128)}', space=vmem, size = 0x10000, scoped, tag = 'scratch operand']
  %s0 = inlined_call_operand.hbm [shape: f32[2,128,128], index: 0, kind: input, shape index: {}]
  %s1 = inlined_call_operand.hbm [shape: f32[2,128,128], index: 1, kind: input, shape index: {}]
  %s2 = inlined_call_operand.vmem [shape: f32[2,128,256], index: 2, kind: input, shape index: {}]
  %s3 = inlined_call_operand.vmem [shape: s32[2,128,1], index: 3, kind: input, shape index: {}]
  %s4 = inlined_call_operand.vmem [shape: s32[2,1,256], index: 4, kind: input, shape index: {}]
  %s5 = inlined_call_operand.vmem [shape: f32[2,128,1], index: 5, kind: input, shape index: {}]
  %s6 = inlined_call_operand.vmem [shape: f32[2,128,1], index: 6, kind: output, shape index: {}]
  %s7 = sld [smem:[#allocation0]]
  $region73: #{tpu_custom_call.1} parent=0
    _
  %s9 = ssub.s32 1, %s7
  %s10 = scalar_select 0, %s9, %s7
  $region1: #{tpu_custom_call.1} parent=0
    #allocation3 [shape = 'u8[131072]{0}', space=vmem, size = 0x20000, scoped, tag = 'input window, operand 0']
    #allocation4 [shape = 's32[2]{0}', space=sflag, size = 0x8, scoped, tag = 'scoped memory for tpu_custom_call.1']
    #allocation5 [shape = 'u8[131072]{0}', space=vmem, size = 0x20000, scoped, tag = 'input window, operand 1']
    #allocation6 [shape = 's32[2]{0}', space=sflag, size = 0x8, scoped, tag = 'scoped memory for tpu_custom_call.1']
    %11 = vsyncpa [#allocation4], 0
    %s12 = scalar_lea.sflag [#allocation4], 1
    %13 = vsyncpa %s12, 0
    %14 = vsyncpa [#allocation6], 0
    %s15 = scalar_lea.sflag [#allocation6], 1
    %16 = vsyncpa %s15, 0
    loop: start=0, step=1, limit=4
    $region2: #{tpu_custom_call.1} parent=1 // loop_pre_header
      _
    $region3: #{tpu_custom_call.1} parent=1 // loop_header
      %s18 = sphi 0, %s22
      %p19 = scmp.ge.s32.totalorder %s18, 4
      %s25 = sphi 0, %s44
      %s26 = sphi 0, %s40
      %s27 = sphi 0, %s36
      %s28 = sphi 0, %s25
      %s29 = sphi 0, %s26
      %s30 = sphi 0, %s27
      %s31 = sphi 0, %s28
      %s32 = sphi 0, %s29
      %s33 = sphi 0, %s30
      %s49 = sphi 0, %s51
      %s52 = sphi 0, %s49
      %s53 = sphi 0, %s52
      %s69 = sphi 0, %s53
      %s77 = sphi 0, %s79
      %s80 = sphi 0, %s77
      %s81 = sphi 0, %s80
      %s97 = sphi 0, %s81
      %s105 = sphi 0, %s107
      %s108 = sphi 0, %s105
      %s109 = sphi 0, %s108
      %s125 = sphi 0, %s109
      %s133 = sphi 0, %s135
      %s136 = sphi 0, %s133
      %s137 = sphi 0, %s136
      %s153 = sphi 0, %s137
      %s161 = sphi 0, %s163
      %s164 = sphi 0, %s161
      %s165 = sphi 0, %s164
      %s181 = sphi 0, %s165
      %s189 = sphi 0, %s191
      %s192 = sphi 0, %s189
      %s193 = sphi 0, %s192
      %s209 = sphi 0, %s193
      %s217 = sphi 0, %s219
      %s220 = sphi 0, %s217
      %s221 = sphi 0, %s220
      %s237 = sphi 0, %s221
    $region4: #{tpu_custom_call.1} parent=1 // loop_header_branch
      %21 = sbr.rel (%p19) target = $region8
    $region5: #{tpu_custom_call.1} parent=1 // loop_body
      %s23 = ssub.s32 %s18, 1
      %s24 = ssub.s32 %s18, 2
      %s34 = sadd.s32 1, %s27
      %p35 = scmp.ge.s32.totalorder %s34, 1
      %s36 = scalar_select %p35, 0, %s34
      %s37 = sadd.s32 1, %s26
      %s38 = scalar_select %p35, %s37, %s26
      %p39 = scmp.ge.s32.totalorder %s38, 1
      %s40 = scalar_select %p39, 0, %s38
      %s41 = sadd.s32 1, %s25
      %s42 = scalar_select %p39, %s41, %s25
      %p43 = scmp.ge.s32.totalorder %s42, 2
      %s44 = scalar_select %p43, 0, %s42
      %s45 = ssub.s32 %s25, %s44
      %s46 = ssub.s32 %s26, %s40
      %s47 = sor.u32 %s45, %s46
      %p48 = scmp.eq.s32.totalorder %s47, 0
      %s50 = sadd.s32 %s49, 1
      %s51 = scalar_select %p48, %s49, %s50
      %p54 = pneg %p48
      %p55 = scmp.eq.s32.totalorder %s18, 1
      %p56 = por %p54, %p55
      %p57 = scmp.ne.s32.totalorder %s49, %s52
      %p58 = scmp.eq.s32.totalorder %s18, 0
      %p59 = por %p57, %p58
      %p60 = scmp.ne.s32.totalorder %s49, %s52
      %p61 = scmp.eq.s32.totalorder %s23, 1
      %p62 = por %p60, %p61
      %p63 = scmp.ne.s32.totalorder %s52, %s53
      %p64 = scmp.eq.s32.totalorder %s23, 0
      %p65 = por %p63, %p64
      %p66 = scmp.ne.s32.totalorder %s52, %s53
      %p67 = scmp.eq.s32.totalorder %s24, 1
      %p68 = por %p66, %p67
      %p70 = scmp.ne.s32.totalorder %s53, %s69
      %p71 = scmp.eq.s32.totalorder %s24, 0
      %p72 = por %p70, %p71
      %s73 = ssub.s32 %s25, %s44
      %s74 = ssub.s32 %s26, %s40
      %s75 = sor.u32 %s73, %s74
      %p76 = scmp.eq.s32.totalorder %s75, 0
      %s78 = sadd.s32 %s77, 1
      %s79 = scalar_select %p76, %s77, %s78
      %p82 = pneg %p76
      %p83 = scmp.eq.s32.totalorder %s18, 1
      %p84 = por %p82, %p83
      %p85 = scmp.ne.s32.totalorder %s77, %s80
      %p86 = scmp.eq.s32.totalorder %s18, 0
      %p87 = por %p85, %p86
      %p88 = scmp.ne.s32.totalorder %s77, %s80
      %p89 = scmp.eq.s32.totalorder %s23, 1
      %p90 = por %p88, %p89
      %p91 = scmp.ne.s32.totalorder %s80, %s81
      %p92 = scmp.eq.s32.totalorder %s23, 0
      %p93 = por %p91, %p92
      %p94 = scmp.ne.s32.totalorder %s80, %s81
      %p95 = scmp.eq.s32.totalorder %s24, 1
      %p96 = por %p94, %p95
      %p98 = scmp.ne.s32.totalorder %s81, %s97
      %p99 = scmp.eq.s32.totalorder %s24, 0
      %p100 = por %p98, %p99
      %s101 = ssub.s32 %s25, %s44
      %s102 = ssub.s32 %s27, %s36
      %s103 = sor.u32 %s101, %s102
      %p104 = scmp.eq.s32.totalorder %s103, 0
      %s106 = sadd.s32 %s105, 1
      %s107 = scalar_select %p104, %s105, %s106
      %p110 = pneg %p104
      %p111 = scmp.eq.s32.totalorder %s18, 1
      %p112 = por %p110, %p111
      %p113 = scmp.ne.s32.totalorder %s105, %s108
      %p114 = scmp.eq.s32.totalorder %s18, 0
      %p115 = por %p113, %p114
      %p116 = scmp.ne.s32.totalorder %s105, %s108
      %p117 = scmp.eq.s32.totalorder %s23, 1
      %p118 = por %p116, %p117
      %p119 = scmp.ne.s32.totalorder %s108, %s109
      %p120 = scmp.eq.s32.totalorder %s23, 0
      %p121 = por %p119, %p120
      %p122 = scmp.ne.s32.totalorder %s108, %s109
      %p123 = scmp.eq.s32.totalorder %s24, 1
      %p124 = por %p122, %p123
      %p126 = scmp.ne.s32.totalorder %s109, %s125
      %p127 = scmp.eq.s32.totalorder %s24, 0
      %p128 = por %p126, %p127
      %s129 = ssub.s32 %s25, %s44
      %s130 = ssub.s32 %s26, %s40
      %s131 = sor.u32 %s129, %s130
      %p132 = scmp.eq.s32.totalorder %s131, 0
      %s134 = sadd.s32 %s133, 1
      %s135 = scalar_select %p132, %s133, %s134
      %p138 = pneg %p132
      %p139 = scmp.eq.s32.totalorder %s18, 1
      %p140 = por %p138, %p139
      %p141 = scmp.ne.s32.totalorder %s133, %s136
      %p142 = scmp.eq.s32.totalorder %s18, 0
      %p143 = por %p141, %p142
      %p144 = scmp.ne.s32.totalorder %s133, %s136
      %p145 = scmp.eq.s32.totalorder %s23, 1
      %p146 = por %p144, %p145
      %p147 = scmp.ne.s32.totalorder %s136, %s137
      %p148 = scmp.eq.s32.totalorder %s23, 0
      %p149 = por %p147, %p148
      %p150 = scmp.ne.s32.totalorder %s136, %s137
      %p151 = scmp.eq.s32.totalorder %s24, 1
      %p152 = por %p150, %p151
      %p154 = scmp.ne.s32.totalorder %s137, %s153
      %p155 = scmp.eq.s32.totalorder %s24, 0
      %p156 = por %p154, %p155
      %s157 = ssub.s32 %s25, %s44
      %s158 = ssub.s32 %s27, %s36
      %s159 = sor.u32 %s157, %s158
      %p160 = scmp.eq.s32.totalorder %s159, 0
      %s162 = sadd.s32 %s161, 1
      %s163 = scalar_select %p160, %s161, %s162
      %p166 = pneg %p160
      %p167 = scmp.eq.s32.totalorder %s18, 1
      %p168 = por %p166, %p167
      %p169 = scmp.ne.s32.totalorder %s161, %s164
      %p170 = scmp.eq.s32.totalorder %s18, 0
      %p171 = por %p169, %p170
      %p172 = scmp.ne.s32.totalorder %s161, %s164
      %p173 = scmp.eq.s32.totalorder %s23, 1
      %p174 = por %p172, %p173
      %p175 = scmp.ne.s32.totalorder %s164, %s165
      %p176 = scmp.eq.s32.totalorder %s23, 0
      %p177 = por %p175, %p176
      %p178 = scmp.ne.s32.totalorder %s164, %s165
      %p179 = scmp.eq.s32.totalorder %s24, 1
      %p180 = por %p178, %p179
      %p182 = scmp.ne.s32.totalorder %s165, %s181
      %p183 = scmp.eq.s32.totalorder %s24, 0
      %p184 = por %p182, %p183
      %s185 = ssub.s32 %s25, %s44
      %s186 = ssub.s32 %s26, %s40
      %s187 = sor.u32 %s185, %s186
      %p188 = scmp.eq.s32.totalorder %s187, 0
      %s190 = sadd.s32 %s189, 1
      %s191 = scalar_select %p188, %s189, %s190
      %p194 = pneg %p188
      %p195 = scmp.eq.s32.totalorder %s18, 1
      %p196 = por %p194, %p195
      %p197 = scmp.ne.s32.totalorder %s189, %s192
      %p198 = scmp.eq.s32.totalorder %s18, 0
      %p199 = por %p197, %p198
      %p200 = scmp.ne.s32.totalorder %s189, %s192
      %p201 = scmp.eq.s32.totalorder %s23, 1
      %p202 = por %p200, %p201
      %p203 = scmp.ne.s32.totalorder %s192, %s193
      %p204 = scmp.eq.s32.totalorder %s23, 0
      %p205 = por %p203, %p204
      %p206 = scmp.ne.s32.totalorder %s192, %s193
      %p207 = scmp.eq.s32.totalorder %s24, 1
      %p208 = por %p206, %p207
      %p210 = scmp.ne.s32.totalorder %s193, %s209
      %p211 = scmp.eq.s32.totalorder %s24, 0
      %p212 = por %p210, %p211
      %s213 = ssub.s32 %s25, %s44
      %s214 = ssub.s32 %s26, %s40
      %s215 = sor.u32 %s213, %s214
      %p216 = scmp.eq.s32.totalorder %s215, 0
      %s218 = sadd.s32 %s217, 1
      %s219 = scalar_select %p216, %s217, %s218
      %p222 = pneg %p216
      %p223 = scmp.eq.s32.totalorder %s18, 1
      %p224 = por %p222, %p223
      %p225 = scmp.ne.s32.totalorder %s217, %s220
      %p226 = scmp.eq.s32.totalorder %s18, 0
      %p227 = por %p225, %p226
      %p228 = scmp.ne.s32.totalorder %s217, %s220
      %p229 = scmp.eq.s32.totalorder %s23, 1
      %p230 = por %p228, %p229
      %p231 = scmp.ne.s32.totalorder %s220, %s221
      %p232 = scmp.eq.s32.totalorder %s23, 0
      %p233 = por %p231, %p232
      %p234 = scmp.ne.s32.totalorder %s220, %s221
      %p235 = scmp.eq.s32.totalorder %s24, 1
      %p236 = por %p234, %p235
      %p238 = scmp.ne.s32.totalorder %s221, %s237
      %p239 = scmp.eq.s32.totalorder %s24, 0
      %p240 = por %p238, %p239
      %p241 = scmp.le.s32.totalorder 1, %s18
      %p242 = scmp.lt.s32.totalorder %s18, 3
      %p243 = pnand %p241, %p242
      %p244 = pneg %p243
      // Predicated region
      $region9: #{tpu_custom_call.1} parent=5 // pred_check
        _
      $region10: #{tpu_custom_call.1} parent=5 // pred_check_branch
        %246 = sbr.rel (%p243) target = $region12
      $region11: #{tpu_custom_call.1} parent=5 // pred_region
        %s247 = ssub.s32 %s18, 1
      $region12: #{tpu_custom_call.1} parent=5 // pred_fallthru
        _
      %p248 = scmp.lt.s32.totalorder %s18, 2
      // Predicated region
      $region13: #{tpu_custom_call.1} parent=5 // pred_check
        %p249 = pneg %p248
      $region14: #{tpu_custom_call.1} parent=5 // pred_check_branch
        %251 = sbr.rel (%p249) target = $region16
      $region15: #{tpu_custom_call.1} parent=5 // pred_region
        // Predicated region
        $region17: #{tpu_custom_call.1} parent=15 // pred_check
          %p252 = pneg %p59
        $region18: #{tpu_custom_call.1} parent=15 // pred_check_branch
          %254 = sbr.rel (%p252) target = $region20
        $region19: #{tpu_custom_call.1} parent=15 // pred_region
          %s255 = sand.u32 %s49, 1
          %s256 = scalar_lea.sflag [#allocation4], %s255
          %s257 = sand.u32 %s49, 1
          %s258 = smul.addr %s257, 128
          %s259 = scalar_lea.vmem [#allocation3], %s258
          %s260 = smul.u32 16, %s26
          %s262 = ssub.s32 2048, 2048
          %263 = vsyncadd %s256, %s262
          %s264 = smul.addr %s25, 16
          %s265 = sadd.s32 %s260, %s264
          %s266 = smul.addr %s265, 128
          %s267 = scalar_lea.hbm %s0, %s266
          %s268 = sshll.u32 %s259, 4
          %s269 = int_to_ptr.vmem [resolvable:$true] %s268
          %274 = dma.hbm_to_vmem [thread:$0]  %s267, 2048, %s269, %s256, 128, 128, 8
        $region20: #{tpu_custom_call.1} parent=15 // pred_fallthru
          _
        // Predicated region
        $region21: #{tpu_custom_call.1} parent=15 // pred_check
          %p275 = pneg %p87
        $region22: #{tpu_custom_call.1} parent=15 // pred_check_branch
          %277 = sbr.rel (%p275) target = $region24
        $region23: #{tpu_custom_call.1} parent=15 // pred_region
          %s278 = sand.u32 %s77, 1
          %s279 = scalar_lea.sflag [#allocation6], %s278
          %s280 = sand.u32 %s77, 1
          %s281 = smul.addr %s280, 128
          %s282 = scalar_lea.vmem [#allocation5], %s281
          %s283 = smul.u32 16, %s26
          %s285 = ssub.s32 2048, 2048
          %286 = vsyncadd %s279, %s285
          %s287 = smul.addr %s25, 16
          %s288 = sadd.s32 %s283, %s287
          %s289 = smul.addr %s288, 128
          %s290 = scalar_lea.hbm %s1, %s289
          %s291 = sshll.u32 %s282, 4
          %s292 = int_to_ptr.vmem [resolvable:$true] %s291
          %297 = dma.hbm_to_vmem [thread:$0]  %s290, 2048, %s292, %s279, 128, 128, 8
        $region24: #{tpu_custom_call.1} parent=15 // pred_fallthru
          _
        // Predicated region
        $region25: #{tpu_custom_call.1} parent=15 // pred_check
          %p298 = pneg %p115
        $region26: #{tpu_custom_call.1} parent=15 // pred_check_branch
          %300 = sbr.rel (%p298) target = $region28
        $region27: #{tpu_custom_call.1} parent=15 // pred_region
          %s301 = smul.u32 2, %s27
          %p302 = scmp.lt.s32.totalorder %s25, 1
          %s303 = scalar_select %p302, %s25, 1
          %p304 = scmp.lt.s32.totalorder %s301, 1
          %s305 = scalar_select %p304, %s301, 1
          %s306 = smul.addr %s303, 32
          %s307 = sadd.s32 %s305, %s306
          %s308 = smul.addr %s307, 8
          %s309 = scalar_lea.vmem %s2, %s308
          %s310 = smul.u32 2, %s27
        $region28: #{tpu_custom_call.1} parent=15 // pred_fallthru
          _
        // Predicated region
        $region29: #{tpu_custom_call.1} parent=15 // pred_check
          %p311 = pneg %p143
        $region30: #{tpu_custom_call.1} parent=15 // pred_check_branch
          %313 = sbr.rel (%p311) target = $region32
        $region31: #{tpu_custom_call.1} parent=15 // pred_region
          %s314 = smul.u32 16, %s26
          %p315 = scmp.lt.s32.totalorder %s25, 1
          %s316 = scalar_select %p315, %s25, 1
          %p317 = scmp.lt.s32.totalorder %s314, 15
          %s318 = scalar_select %p317, %s314, 15
          %s319 = smul.addr %s316, 16
          %s320 = sadd.s32 %s318, %s319
          %s321 = smul.addr %s320, 8
          %s322 = scalar_lea.vmem %s3, %s321
          %s323 = smul.u32 16, %s26
        $region32: #{tpu_custom_call.1} parent=15 // pred_fallthru
          _
        // Predicated region
        $region33: #{tpu_custom_call.1} parent=15 // pred_check
          %p324 = pneg %p171
        $region34: #{tpu_custom_call.1} parent=15 // pred_check_branch
          %326 = sbr.rel (%p324) target = $region36
        $region35: #{tpu_custom_call.1} parent=15 // pred_region
          %s327 = smul.u32 2, %s27
          %p328 = scmp.lt.s32.totalorder %s25, 1
          %s329 = scalar_select %p328, %s25, 1
          %p330 = scmp.lt.s32.totalorder %s327, 1
          %s331 = scalar_select %p330, %s327, 1
          %s332 = smul.addr %s329, 2
          %s333 = sadd.s32 %s331, %s332
          %s334 = scalar_lea.vmem %s4, %s333
          %s335 = smul.u32 2, %s27
        $region36: #{tpu_custom_call.1} parent=15 // pred_fallthru
          _
        // Predicated region
        $region37: #{tpu_custom_call.1} parent=15 // pred_check
          %p336 = pneg %p199
        $region38: #{tpu_custom_call.1} parent=15 // pred_check_branch
          %338 = sbr.rel (%p336) target = $region40
        $region39: #{tpu_custom_call.1} parent=15 // pred_region
          %s339 = smul.u32 16, %s26
          %p340 = scmp.lt.s32.totalorder %s25, 1
          %s341 = scalar_select %p340, %s25, 1
          %p342 = scmp.lt.s32.totalorder %s339, 15
          %s343 = scalar_select %p342, %s339, 15
          %s344 = smul.addr %s341, 16
          %s345 = sadd.s32 %s343, %s344
          %s346 = smul.addr %s345, 8
          %s347 = scalar_lea.vmem %s5, %s346
          %s348 = smul.u32 16, %s26
        $region40: #{tpu_custom_call.1} parent=15 // pred_fallthru
          _
      $region16: #{tpu_custom_call.1} parent=5 // pred_fallthru
        _
      %p349 = scmp.le.s32.totalorder 1, %s18
      %p350 = scmp.lt.s32.totalorder %s18, 3
      %p351 = pnand %p349, %p350
      %p352 = pneg %p351
      // Predicated region
      $region41: #{tpu_custom_call.1} parent=5 // pred_check
        _
      $region42: #{tpu_custom_call.1} parent=5 // pred_check_branch
        %354 = sbr.rel (%p351) target = $region44
      $region43: #{tpu_custom_call.1} parent=5 // pred_region
        %s355 = ssub.s32 %s18, 1
        %s356 = sand.u32 %s52, 1
        %s357 = scalar_lea.sflag [#allocation4], %s356
        %s358 = sand.u32 %s52, 1
        %s359 = smul.addr %s358, 128
        %s360 = scalar_lea.vmem [#allocation3], %s359
        // Predicated region
        $region45: #{tpu_custom_call.1} parent=43 // pred_check
          %p361 = pneg %p65
        $region46: #{tpu_custom_call.1} parent=43 // pred_check_branch
          %363 = sbr.rel (%p361) target = $region48
        $region47: #{tpu_custom_call.1} parent=43 // pred_region
          %364 = dma.done %s357, 2048
        $region48: #{tpu_custom_call.1} parent=43 // pred_fallthru
          _
        %s365 = sand.u32 %s80, 1
        %s366 = scalar_lea.sflag [#allocation6], %s365
        %s367 = sand.u32 %s80, 1
        %s368 = smul.addr %s367, 128
        %s369 = scalar_lea.vmem [#allocation5], %s368
        // Predicated region
        $region49: #{tpu_custom_call.1} parent=43 // pred_check
          %p370 = pneg %p93
        $region50: #{tpu_custom_call.1} parent=43 // pred_check_branch
          %372 = sbr.rel (%p370) target = $region52
        $region51: #{tpu_custom_call.1} parent=43 // pred_region
          %373 = dma.done %s366, 2048
        $region52: #{tpu_custom_call.1} parent=43 // pred_fallthru
          _
        %s374 = sand.u32 %s52, 1
        %s375 = scalar_lea.sflag [#allocation4], %s374
        %s376 = sand.u32 %s52, 1
        %s377 = smul.addr %s376, 128
        %s378 = scalar_lea.vmem [#allocation3], %s377
        %p379 = pneg %p65
        %p380 = pneg %p62
        %s381 = sand.u32 %s80, 1
        %s382 = scalar_lea.sflag [#allocation6], %s381
        %s383 = sand.u32 %s80, 1
        %s384 = smul.addr %s383, 128
        %s385 = scalar_lea.vmem [#allocation5], %s384
        %p386 = pneg %p93
        %p387 = pneg %p90
        %s388 = smul.u32 2, %s30
        %p389 = scmp.lt.s32.totalorder %s28, 1
        %s390 = scalar_select %p389, %s28, 1
        %p391 = scmp.lt.s32.totalorder %s388, 1
        %s392 = scalar_select %p391, %s388, 1
        %s393 = smul.addr %s390, 32
        %s394 = sadd.s32 %s392, %s393
        %s395 = smul.addr %s394, 8
        %s396 = scalar_lea.vmem %s2, %s395
        %p397 = pneg %p121
        %p398 = pneg %p118
        %s399 = smul.u32 16, %s29
        %p400 = scmp.lt.s32.totalorder %s28, 1
        %s401 = scalar_select %p400, %s28, 1
        %p402 = scmp.lt.s32.totalorder %s399, 15
        %s403 = scalar_select %p402, %s399, 15
        %s404 = smul.addr %s401, 16
        %s405 = sadd.s32 %s403, %s404
        %s406 = smul.addr %s405, 8
        %s407 = scalar_lea.vmem %s3, %s406
        %p408 = pneg %p149
        %p409 = pneg %p146
        %s410 = smul.u32 2, %s30
        %p411 = scmp.lt.s32.totalorder %s28, 1
        %s412 = scalar_select %p411, %s28, 1
        %p413 = scmp.lt.s32.totalorder %s410, 1
        %s414 = scalar_select %p413, %s410, 1
        %s415 = smul.addr %s412, 2
        %s416 = sadd.s32 %s414, %s415
        %s417 = scalar_lea.vmem %s4, %s416
        %p418 = pneg %p177
        %p419 = pneg %p174
        %s420 = smul.u32 16, %s29
        %p421 = scmp.lt.s32.totalorder %s28, 1
        %s422 = scalar_select %p421, %s28, 1
        %p423 = scmp.lt.s32.totalorder %s420, 15
        %s424 = scalar_select %p423, %s420, 15
        %s425 = smul.addr %s422, 16
        %s426 = sadd.s32 %s424, %s425
        %s427 = smul.addr %s426, 8
        %s428 = scalar_lea.vmem %s5, %s427
        %p429 = pneg %p205
        %p430 = pneg %p202
        %p431 = pneg %p233
        %p432 = pneg %p230
        %s433 = smul.u32 16, %s29
        %p434 = scmp.lt.s32.totalorder %s28, 1
        %s435 = scalar_select %p434, %s28, 1
        %p436 = scmp.lt.s32.totalorder %s433, 15
        %s437 = scalar_select %p436, %s433, 15
        %s438 = smul.addr %s435, 16
        %s439 = sadd.s32 %s437, %s438
        %s440 = smul.addr %s439, 8
        %s441 = scalar_lea.vmem %s6, %s440
        %s442 = smul.u32 16, %s29
        %s443 = smul.u32 16, %s29
        %s444 = smul.u32 2, %s30
        %p445 = scmp.lt.s32.totalorder %s28, 1
        %s446 = scalar_select %p445, %s28, 1
        %p447 = scmp.lt.s32.totalorder %s444, 1
        %s448 = scalar_select %p447, %s444, 1
        %s449 = smul.addr %s446, 32
        %s450 = sadd.s32 %s448, %s449
        %s451 = smul.addr %s450, 8
        %s452 = scalar_lea.vmem %s2, %s451
        %s453 = smul.u32 2, %s30
        %s454 = smul.u32 16, %s29
        %p455 = scmp.lt.s32.totalorder %s28, 1
        %s456 = scalar_select %p455, %s28, 1
        %p457 = scmp.lt.s32.totalorder %s454, 15
        %s458 = scalar_select %p457, %s454, 15
        %s459 = smul.addr %s456, 16
        %s460 = sadd.s32 %s458, %s459
        %s461 = smul.addr %s460, 8
        %s462 = scalar_lea.vmem %s3, %s461
        %s463 = smul.u32 16, %s29
        %s464 = smul.u32 2, %s30
        %p465 = scmp.lt.s32.totalorder %s28, 1
        %s466 = scalar_select %p465, %s28, 1
        %p467 = scmp.lt.s32.totalorder %s464, 1
        %s468 = scalar_select %p467, %s464, 1
        %s469 = smul.addr %s466, 2
        %s470 = sadd.s32 %s468, %s469
        %s471 = scalar_lea.vmem %s4, %s470
        %s472 = smul.u32 2, %s30
        %s473 = smul.u32 16, %s29
        %p474 = scmp.lt.s32.totalorder %s28, 1
        %s475 = scalar_select %p474, %s28, 1
        %p476 = scmp.lt.s32.totalorder %s473, 15
        %s477 = scalar_select %p476, %s473, 15
        %s478 = smul.addr %s475, 16
        %s479 = sadd.s32 %s477, %s478
        %s480 = smul.addr %s479, 8
        %s481 = scalar_lea.vmem %s5, %s480
        %s482 = smul.u32 16, %s29
        %s483 = smul.u32 16, %s29
        %p484 = scmp.lt.s32.totalorder %s28, 1
        %s485 = scalar_select %p484, %s28, 1
        %p486 = scmp.lt.s32.totalorder %s483, 15
        %s487 = scalar_select %p486, %s483, 15
        %s488 = smul.addr %s485, 16
        %s489 = sadd.s32 %s487, %s488
        %s490 = smul.addr %s489, 8
        %s491 = scalar_lea.vmem %s6, %s490
        %s492 = smul.u32 16, %s29
        %p494 = scmp.eq.s32.totalorder %s30, 0
        // Predicated region
        $region53: #{tpu_custom_call.1} parent=43 // pred_check
          %p495 = pneg %p494
        $region54: #{tpu_custom_call.1} parent=43 // pred_check_branch
          %497 = sbr.rel (%p495) target = $region56
        $region55: #{tpu_custom_call.1} parent=43 // pred_region
          %498 = vst [vmem:[#allocation2] sm:$0xff] 0.0
          %499 = vst [vmem:[#allocation2 + $0x8] sm:$0xff] 0.0
          %500 = vst [vmem:[#allocation2 + $0x10] sm:$0xff] 0.0
          %501 = vst [vmem:[#allocation2 + $0x18] sm:$0xff] 0.0
          %502 = vst [vmem:[#allocation2 + $0x20] sm:$0xff] 0.0
          %503 = vst [vmem:[#allocation2 + $0x28] sm:$0xff] 0.0
          %504 = vst [vmem:[#allocation2 + $0x30] sm:$0xff] 0.0
          %505 = vst [vmem:[#allocation2 + $0x38] sm:$0xff] 0.0
          %506 = vst [vmem:[#allocation2 + $0x40] sm:$0xff] 0.0
          %507 = vst [vmem:[#allocation2 + $0x48] sm:$0xff] 0.0
          %508 = vst [vmem:[#allocation2 + $0x50] sm:$0xff] 0.0
          %509 = vst [vmem:[#allocation2 + $0x58] sm:$0xff] 0.0
          %510 = vst [vmem:[#allocation2 + $0x60] sm:$0xff] 0.0
          %511 = vst [vmem:[#allocation2 + $0x68] sm:$0xff] 0.0
          %512 = vst [vmem:[#allocation2 + $0x70] sm:$0xff] 0.0
          %513 = vst [vmem:[#allocation2 + $0x78] sm:$0xff] 0.0
        $region56: #{tpu_custom_call.1} parent=43 // pred_fallthru
          _
        %v514 = vld [vmem:[%s360] sm:$0xff]
        %v515 = vld [vmem:[%s360 + $0x8] sm:$0xff]
        %v516 = vld [vmem:[%s360 + $0x10] sm:$0xff]
        %v517 = vld [vmem:[%s360 + $0x18] sm:$0xff]
        %v518 = vld [vmem:[%s360 + $0x20] sm:$0xff]
        %v519 = vld [vmem:[%s360 + $0x28] sm:$0xff]
        %v520 = vld [vmem:[%s360 + $0x30] sm:$0xff]
        %v521 = vld [vmem:[%s360 + $0x38] sm:$0xff]
        %v522 = vld [vmem:[%s360 + $0x40] sm:$0xff]
        %v523 = vld [vmem:[%s360 + $0x48] sm:$0xff]
        %v524 = vld [vmem:[%s360 + $0x50] sm:$0xff]
        %v525 = vld [vmem:[%s360 + $0x58] sm:$0xff]
        %v526 = vld [vmem:[%s360 + $0x60] sm:$0xff]
        %v527 = vld [vmem:[%s360 + $0x68] sm:$0xff]
        %v528 = vld [vmem:[%s360 + $0x70] sm:$0xff]
        %v529 = vld [vmem:[%s360 + $0x78] sm:$0xff]
        %v530 = vld [vmem:[%s452] sm:$0xff]
        %v531 = vld [vmem:[%s452 + $0x8] sm:$0xff]
        %v532 = vld [vmem:[%s452 + $0x10] sm:$0xff]
        %v533 = vld [vmem:[%s452 + $0x18] sm:$0xff]
        %v534 = vld [vmem:[%s452 + $0x20] sm:$0xff]
        %v535 = vld [vmem:[%s452 + $0x28] sm:$0xff]
        %v536 = vld [vmem:[%s452 + $0x30] sm:$0xff]
        %v537 = vld [vmem:[%s452 + $0x38] sm:$0xff]
        %v538 = vld [vmem:[%s452 + $0x40] sm:$0xff]
        %v539 = vld [vmem:[%s452 + $0x48] sm:$0xff]
        %v540 = vld [vmem:[%s452 + $0x50] sm:$0xff]
        %v541 = vld [vmem:[%s452 + $0x58] sm:$0xff]
        %v542 = vld [vmem:[%s452 + $0x60] sm:$0xff]
        %v543 = vld [vmem:[%s452 + $0x68] sm:$0xff]
        %v544 = vld [vmem:[%s452 + $0x70] sm:$0xff]
        %v545 = vld [vmem:[%s452 + $0x78] sm:$0xff]
        %v546 = vld [vmem:[%s452 + $0x80] sm:$0xff]
        %v547 = vld [vmem:[%s452 + $0x88] sm:$0xff]
        %v548 = vld [vmem:[%s452 + $0x90] sm:$0xff]
        %v549 = vld [vmem:[%s452 + $0x98] sm:$0xff]
        %v550 = vld [vmem:[%s452 + $0xa0] sm:$0xff]
        %v551 = vld [vmem:[%s452 + $0xa8] sm:$0xff]
        %v552 = vld [vmem:[%s452 + $0xb0] sm:$0xff]
        %v553 = vld [vmem:[%s452 + $0xb8] sm:$0xff]
        %v554 = vld [vmem:[%s452 + $0xc0] sm:$0xff]
        %v555 = vld [vmem:[%s452 + $0xc8] sm:$0xff]
        %v556 = vld [vmem:[%s452 + $0xd0] sm:$0xff]
        %v557 = vld [vmem:[%s452 + $0xd8] sm:$0xff]
        %v558 = vld [vmem:[%s452 + $0xe0] sm:$0xff]
        %v559 = vld [vmem:[%s452 + $0xe8] sm:$0xff]
        %v560 = vld [vmem:[%s452 + $0xf0] sm:$0xff]
        %v561 = vld [vmem:[%s452 + $0xf8] sm:$0xff]
        %v562 = vpack.c.bf16 %v515, %v514
        %v563 = vpack.c.bf16 %v517, %v516
        %v564 = vpack.c.bf16 %v519, %v518
        %v565 = vpack.c.bf16 %v521, %v520
        %v566 = vpack.c.bf16 %v523, %v522
        %v567 = vpack.c.bf16 %v525, %v524
        %v568 = vpack.c.bf16 %v527, %v526
        %v569 = vpack.c.bf16 %v529, %v528
        %v570 = vpack.c.bf16 %v532, %v530
        %v571 = vpack.c.bf16 %v533, %v531
        %v572 = vpack.c.bf16 %v536, %v534
        %v573 = vpack.c.bf16 %v537, %v535
        %v574 = vpack.c.bf16 %v540, %v538
        %v575 = vpack.c.bf16 %v541, %v539
        %v576 = vpack.c.bf16 %v544, %v542
        %v577 = vpack.c.bf16 %v545, %v543
        %v578 = vpack.c.bf16 %v548, %v546
        %v579 = vpack.c.bf16 %v549, %v547
        %v580 = vpack.c.bf16 %v552, %v550
        %v581 = vpack.c.bf16 %v553, %v551
        %v582 = vpack.c.bf16 %v556, %v554
        %v583 = vpack.c.bf16 %v557, %v555
        %v584 = vpack.c.bf16 %v560, %v558
        %v585 = vpack.c.bf16 %v561, %v559
        %586 = vmatprep.subr.bf16.mxu0 %v571
        %587 = vmatpush1.bf16.msra.mxu0 %v570
        %588 = vmatprep.subr.bf16.mxu0 %v573
        %589 = vmatpush1.bf16.msra.mxu0 %v572
        %590 = vmatprep.subr.bf16.mxu0 %v575
        %591 = vmatpush1.bf16.msra.mxu0 %v574
        %592 = vmatprep.subr.bf16.mxu0 %v577
        %593 = vmatpush1.bf16.msra.mxu0 %v576
        %594 = vmatprep.subr.bf16.mxu0 %v579
        %595 = vmatpush1.bf16.msra.mxu0 %v578
        %596 = vmatprep.subr.bf16.mxu0 %v581
        %597 = vmatpush1.bf16.msra.mxu0 %v580
        %598 = vmatprep.subr.bf16.mxu0 %v583
        %599 = vmatpush1.bf16.msra.mxu0 %v582
        %600 = vmatprep.subr.bf16.mxu0 %v585
        %601 = vmatpush1.bf16.msra.mxu0 %v584
        %602 = vmatprep.subr.bf16.mxu0 0
        %603 = vmatpush1.bf16.msra.mxu0 0
        %604 = vmatprep.subr.bf16.mxu0 0
        %605 = vmatpush1.bf16.msra.mxu0 0
        %606 = vmatprep.subr.bf16.mxu0 0
        %607 = vmatpush1.bf16.msra.mxu0 0
        %608 = vmatprep.subr.bf16.mxu0 0
        %609 = vmatpush1.bf16.msra.mxu0 0
        %610 = vmatprep.subr.bf16.mxu0 0
        %611 = vmatpush1.bf16.msra.mxu0 0
        %612 = vmatprep.subr.bf16.mxu0 0
        %613 = vmatpush1.bf16.msra.mxu0 0
        %614 = vmatprep.subr.bf16.mxu0 0
        %615 = vmatpush1.bf16.msra.mxu0 0
        %616 = vmatprep.subr.bf16.mxu0 0
        %617 = vmatpush1.bf16.msra.mxu0 0
        %618 = vmatprep.mubr.bf16.mxu0 0
        %619 = vmatmul.mubr.bf16.gmra.mrb[0].mxu0 %v562
        %v620 = vpop.f32.mrb[0].mxu0
        %v621 = vadd.f32 0.0, %v620
        %v622 = vpop.f32.mrb[0].mxu0
        %v623 = vadd.f32 0.0, %v622
        %v624 = vpop.f32.mrb[0].mxu0
        %v625 = vadd.f32 0.0, %v624
        %v626 = vpop.f32.mrb[0].mxu0
        %v627 = vadd.f32 0.0, %v626
        %628 = vmatprep.mubr.bf16.mxu0 0
        %629 = vmatmul.mubr.bf16.gmra.mrb[0].mxu0 %v563
        %v630 = vpop.f32.mrb[0].mxu0
        %v631 = vadd.f32 0.0, %v630
        %v632 = vpop.f32.mrb[0].mxu0
        %v633 = vadd.f32 0.0, %v632
        %v634 = vpop.f32.mrb[0].mxu0
        %v635 = vadd.f32 0.0, %v634
        %v636 = vpop.f32.mrb[0].mxu0
        %v637 = vadd.f32 0.0, %v636
        %638 = vmatprep.mubr.bf16.mxu0 0
        %639 = vmatmul.mubr.bf16.gmra.mrb[0].mxu0 %v564
        %v640 = vpop.f32.mrb[0].mxu0
        %v641 = vadd.f32 0.0, %v640
        %v642 = vpop.f32.mrb[0].mxu0
        %v643 = vadd.f32 0.0, %v642
        %v644 = vpop.f32.mrb[0].mxu0
        %v645 = vadd.f32 0.0, %v644
        %v646 = vpop.f32.mrb[0].mxu0
        %v647 = vadd.f32 0.0, %v646
        %648 = vmatprep.mubr.bf16.mxu0 0
        %649 = vmatmul.mubr.bf16.gmra.mrb[0].mxu0 %v565
        %v650 = vpop.f32.mrb[0].mxu0
        %v651 = vadd.f32 0.0, %v650
        %v652 = vpop.f32.mrb[0].mxu0
        %v653 = vadd.f32 0.0, %v652
        %v654 = vpop.f32.mrb[0].mxu0
        %v655 = vadd.f32 0.0, %v654
        %v656 = vpop.f32.mrb[0].mxu0
        %v657 = vadd.f32 0.0, %v656
        %658 = vmatprep.mubr.bf16.mxu0 0
        %659 = vmatmul.mubr.bf16.gmra.mrb[0].mxu0 %v566
        %v660 = vpop.f32.mrb[0].mxu0
        %v661 = vadd.f32 0.0, %v660
        %v662 = vpop.f32.mrb[0].mxu0
        %v663 = vadd.f32 0.0, %v662
        %v664 = vpop.f32.mrb[0].mxu0
        %v665 = vadd.f32 0.0, %v664
        %v666 = vpop.f32.mrb[0].mxu0
        %v667 = vadd.f32 0.0, %v666
        %668 = vmatprep.mubr.bf16.mxu0 0
        %669 = vmatmul.mubr.bf16.gmra.mrb[0].mxu0 %v567
        %v670 = vpop.f32.mrb[0].mxu0
        %v671 = vadd.f32 0.0, %v670
        %v672 = vpop.f32.mrb[0].mxu0
        %v673 = vadd.f32 0.0, %v672
        %v674 = vpop.f32.mrb[0].mxu0
        %v675 = vadd.f32 0.0, %v674
        %v676 = vpop.f32.mrb[0].mxu0
        %v677 = vadd.f32 0.0, %v676
        %678 = vmatprep.mubr.bf16.mxu0 0
        %679 = vmatmul.mubr.bf16.gmra.mrb[0].mxu0 %v568
        %v680 = vpop.f32.mrb[0].mxu0
        %v681 = vadd.f32 0.0, %v680
        %v682 = vpop.f32.mrb[0].mxu0
        %v683 = vadd.f32 0.0, %v682
        %v684 = vpop.f32.mrb[0].mxu0
        %v685 = vadd.f32 0.0, %v684
        %v686 = vpop.f32.mrb[0].mxu0
        %v687 = vadd.f32 0.0, %v686
        %688 = vmatprep.mubr.bf16.mxu0 0
        %689 = vmatmul.mubr.bf16.gmra.mrb[0].mxu0 %v569
        %v690 = vpop.f32.mrb[0].mxu0
        %v691 = vadd.f32 0.0, %v690
        %v692 = vpop.f32.mrb[0].mxu0
        %v693 = vadd.f32 0.0, %v692
        %v694 = vpop.f32.mrb[0].mxu0
        %v695 = vadd.f32 0.0, %v694
        %v696 = vpop.f32.mrb[0].mxu0
        %v697 = vadd.f32 0.0, %v696
        %698 = vdwg.mxu0
        %v699 = vrcp.pop 250.0
        %v700 = vmul.f32 %v621, %v699
        %v701 = vmul.f32 %v623, %v699
        %v702 = vmul.f32 %v625, %v699
        %v703 = vmul.f32 %v627, %v699
        %v704 = vmul.f32 %v631, %v699
        %v705 = vmul.f32 %v633, %v699
        %v706 = vmul.f32 %v635, %v699
        %v707 = vmul.f32 %v637, %v699
        %v708 = vmul.f32 %v641, %v699
        %v709 = vmul.f32 %v643, %v699
        %v710 = vmul.f32 %v645, %v699
        %v711 = vmul.f32 %v647, %v699
        %v712 = vmul.f32 %v651, %v699
        %v713 = vmul.f32 %v653, %v699
        %v714 = vmul.f32 %v655, %v699
        %v715 = vmul.f32 %v657, %v699
        %v716 = vmul.f32 %v661, %v699
        %v717 = vmul.f32 %v663, %v699
        %v718 = vmul.f32 %v665, %v699
        %v719 = vmul.f32 %v667, %v699
        %v720 = vmul.f32 %v671, %v699
        %v721 = vmul.f32 %v673, %v699
        %v722 = vmul.f32 %v675, %v699
        %v723 = vmul.f32 %v677, %v699
        %v724 = vmul.f32 %v681, %v699
        %v725 = vmul.f32 %v683, %v699
        %v726 = vmul.f32 %v685, %v699
        %v727 = vmul.f32 %v687, %v699
        %v728 = vmul.f32 %v691, %v699
        %v729 = vmul.f32 %v693, %v699
        %v730 = vmul.f32 %v695, %v699
        %v731 = vmul.f32 %v697, %v699
        %s732 = smul.u32 %s30, 256
        %v733 = vlaneseq
        %v734 = vand.u32 %v733, 127
        %v735 = vadd.s32 %v734, 128
        %v736 = vstv %s732
        %v737 = vadd.s32 %v736, %v734
        %v738 = vadd.s32 %v736, %v735
        %vm739 = vcmp.lt.s32.totalorder %v737, 256
        %vm740 = vcmp.lt.s32.totalorder %v738, 256
        %v741 = vld [vmem:[%s462] sm:$0xff]
        %v742 = vld [vmem:[%s462 + $0x8] sm:$0xff]
        %v743 = vld [vmem:[%s462 + $0x10] sm:$0xff]
        %v744 = vld [vmem:[%s462 + $0x18] sm:$0xff]
        %v745 = vld [vmem:[%s462 + $0x20] sm:$0xff]
        %v746 = vld [vmem:[%s462 + $0x28] sm:$0xff]
        %v747 = vld [vmem:[%s462 + $0x30] sm:$0xff]
        %v748 = vld [vmem:[%s462 + $0x38] sm:$0xff]
        %v749 = vld [vmem:[%s462 + $0x40] sm:$0xff]
        %v750 = vld [vmem:[%s462 + $0x48] sm:$0xff]
        %v751 = vld [vmem:[%s462 + $0x50] sm:$0xff]
        %v752 = vld [vmem:[%s462 + $0x58] sm:$0xff]
        %v753 = vld [vmem:[%s462 + $0x60] sm:$0xff]
        %v754 = vld [vmem:[%s462 + $0x68] sm:$0xff]
        %v755 = vld [vmem:[%s462 + $0x70] sm:$0xff]
        %v756 = vld [vmem:[%s462 + $0x78] sm:$0xff]
        %v757 = vld [vmem:[%s471] sm:$0x3]
        %758 = vset.pattern.permute.xlu0 0
        %759 = vperm.xlu0 %758, %v741
        %v760 = vpop.permute.xlu0 %759
        %761 = vset.pattern.permute.xlu0 0
        %762 = vperm.xlu0 %761, %v742
        %v763 = vpop.permute.xlu0 %762
        %764 = vset.pattern.permute.xlu0 0
        %765 = vperm.xlu0 %764, %v743
        %v766 = vpop.permute.xlu0 %765
        %767 = vset.pattern.permute.xlu0 0
        %768 = vperm.xlu0 %767, %v744
        %v769 = vpop.permute.xlu0 %768
        %770 = vset.pattern.permute.xlu0 0
        %771 = vperm.xlu0 %770, %v745
        %v772 = vpop.permute.xlu0 %771
        %773 = vset.pattern.permute.xlu0 0
        %774 = vperm.xlu0 %773, %v746
        %v775 = vpop.permute.xlu0 %774
        %776 = vset.pattern.permute.xlu0 0
        %777 = vperm.xlu0 %776, %v747
        %v778 = vpop.permute.xlu0 %777
        %779 = vset.pattern.permute.xlu0 0
        %780 = vperm.xlu0 %779, %v748
        %v781 = vpop.permute.xlu0 %780
        %782 = vset.pattern.permute.xlu0 0
        %783 = vperm.xlu0 %782, %v749
        %v784 = vpop.permute.xlu0 %783
        %785 = vset.pattern.permute.xlu0 0
        %786 = vperm.xlu0 %785, %v750
        %v787 = vpop.permute.xlu0 %786
        %788 = vset.pattern.permute.xlu0 0
        %789 = vperm.xlu0 %788, %v751
        %v790 = vpop.permute.xlu0 %789
        %791 = vset.pattern.permute.xlu0 0
        %792 = vperm.xlu0 %791, %v752
        %v793 = vpop.permute.xlu0 %792
        %794 = vset.pattern.permute.xlu0 0
        %795 = vperm.xlu0 %794, %v753
        %v796 = vpop.permute.xlu0 %795
        %797 = vset.pattern.permute.xlu0 0
        %798 = vperm.xlu0 %797, %v754
        %v799 = vpop.permute.xlu0 %798
        %800 = vset.pattern.permute.xlu0 0
        %801 = vperm.xlu0 %800, %v755
        %v802 = vpop.permute.xlu0 %801
        %803 = vset.pattern.permute.xlu0 0
        %804 = vperm.xlu0 %803, %v756
        %v805 = vpop.permute.xlu0 %804
        %v806 = vlaneseq
        %v807 = vshrl.u32 %v806, 7
        %v808 = vsub.s32 0, %v807
        %v809 = vrot.slane %v757, %v808
        %v810 = vlaneseq
        %v811 = vshrl.u32 %v810, 7
        %v812 = vsub.s32 1, %v811
        %v813 = vrot.slane %v757, %v812
        %vm814 = vcmp.ne.s32.totalorder %v760, %v809
        %vm815 = vcmp.ne.s32.totalorder %v760, %v813
        %vm816 = vcmp.ne.s32.totalorder %v763, %v809
        %vm817 = vcmp.ne.s32.totalorder %v763, %v813
        %vm818 = vcmp.ne.s32.totalorder %v766, %v809
        %vm819 = vcmp.ne.s32.totalorder %v766, %v813
        %vm820 = vcmp.ne.s32.totalorder %v769, %v809
        %vm821 = vcmp.ne.s32.totalorder %v769, %v813
        %vm822 = vcmp.ne.s32.totalorder %v772, %v809
        %vm823 = vcmp.ne.s32.totalorder %v772, %v813
        %vm824 = vcmp.ne.s32.totalorder %v775, %v809
        %vm825 = vcmp.ne.s32.totalorder %v775, %v813
        %vm826 = vcmp.ne.s32.totalorder %v778, %v809
        %vm827 = vcmp.ne.s32.totalorder %v778, %v813
        %vm828 = vcmp.ne.s32.totalorder %v781, %v809
        %vm829 = vcmp.ne.s32.totalorder %v781, %v813
        %vm830 = vcmp.ne.s32.totalorder %v784, %v809
        %vm831 = vcmp.ne.s32.totalorder %v784, %v813
        %vm832 = vcmp.ne.s32.totalorder %v787, %v809
        %vm833 = vcmp.ne.s32.totalorder %v787, %v813
        %vm834 = vcmp.ne.s32.totalorder %v790, %v809
        %vm835 = vcmp.ne.s32.totalorder %v790, %v813
        %vm836 = vcmp.ne.s32.totalorder %v793, %v809
        %vm837 = vcmp.ne.s32.totalorder %v793, %v813
        %vm838 = vcmp.ne.s32.totalorder %v796, %v809
        %vm839 = vcmp.ne.s32.totalorder %v796, %v813
        %vm840 = vcmp.ne.s32.totalorder %v799, %v809
        %vm841 = vcmp.ne.s32.totalorder %v799, %v813
        %vm842 = vcmp.ne.s32.totalorder %v802, %v809
        %vm843 = vcmp.ne.s32.totalorder %v802, %v813
        %vm844 = vcmp.ne.s32.totalorder %v805, %v809
        %vm845 = vcmp.ne.s32.totalorder %v805, %v813
        %v846 = vsel %vm739, 1, 0
        %v847 = vsel %vm740, 1, 0
        %vm848 = vcmp.eq.s32.totalorder %v846, 1
        %vm849 = vcmp.eq.s32.totalorder %v847, 1
        %vm850 = vmand %vm814, %vm848
        %vm851 = vmand %vm815, %vm849
        %vm852 = vmand %vm816, %vm848
        %vm853 = vmand %vm817, %vm849
        %vm854 = vmand %vm818, %vm848
        %vm855 = vmand %vm819, %vm849
        %vm856 = vmand %vm820, %vm848
        %vm857 = vmand %vm821, %vm849
        %vm858 = vmand %vm822, %vm848
        %vm859 = vmand %vm823, %vm849
        %vm860 = vmand %vm824, %vm848
        %vm861 = vmand %vm825, %vm849
        %vm862 = vmand %vm826, %vm848
        %vm863 = vmand %vm827, %vm849
        %vm864 = vmand %vm828, %vm848
        %vm865 = vmand %vm829, %vm849
        %vm866 = vmand %vm830, %vm848
        %vm867 = vmand %vm831, %vm849
        %vm868 = vmand %vm832, %vm848
        %vm869 = vmand %vm833, %vm849
        %vm870 = vmand %vm834, %vm848
        %vm871 = vmand %vm835, %vm849
        %vm872 = vmand %vm836, %vm848
        %vm873 = vmand %vm837, %vm849
        %vm874 = vmand %vm838, %vm848
        %vm875 = vmand %vm839, %vm849
        %vm876 = vmand %vm840, %vm848
        %vm877 = vmand %vm841, %vm849
        %vm878 = vmand %vm842, %vm848
        %vm879 = vmand %vm843, %vm849
        %vm880 = vmand %vm844, %vm848
        %vm881 = vmand %vm845, %vm849
        %v882 = vmul.f32 %v700, 1.442695
        %v883 = vpow.pop %v882
        %v884 = vmul.f32 %v701, 1.442695
        %v885 = vpow.pop %v884
        %v886 = vmul.f32 %v702, 1.442695
        %v887 = vpow.pop %v886
        %v888 = vmul.f32 %v703, 1.442695
        %v889 = vpow.pop %v888
        %v890 = vmul.f32 %v704, 1.442695
        %v891 = vpow.pop %v890
        %v892 = vmul.f32 %v705, 1.442695
        %v893 = vpow.pop %v892
        %v894 = vmul.f32 %v706, 1.442695
        %v895 = vpow.pop %v894
        %v896 = vmul.f32 %v707, 1.442695
        %v897 = vpow.pop %v896
        %v898 = vmul.f32 %v708, 1.442695
        %v899 = vpow.pop %v898
        %v900 = vmul.f32 %v709, 1.442695
        %v901 = vpow.pop %v900
        %v902 = vmul.f32 %v710, 1.442695
        %v903 = vpow.pop %v902
        %v904 = vmul.f32 %v711, 1.442695
        %v905 = vpow.pop %v904
        %v906 = vmul.f32 %v712, 1.442695
        %v907 = vpow.pop %v906
        %v908 = vmul.f32 %v713, 1.442695
        %v909 = vpow.pop %v908
        %v910 = vmul.f32 %v714, 1.442695
        %v911 = vpow.pop %v910
        %v912 = vmul.f32 %v715, 1.442695
        %v913 = vpow.pop %v912
        %v914 = vmul.f32 %v716, 1.442695
        %v915 = vpow.pop %v914
        %v916 = vmul.f32 %v717, 1.442695
        %v917 = vpow.pop %v916
        %v918 = vmul.f32 %v718, 1.442695
        %v919 = vpow.pop %v918
        %v920 = vmul.f32 %v719, 1.442695
        %v921 = vpow.pop %v920
        %v922 = vmul.f32 %v720, 1.442695
        %v923 = vpow.pop %v922
        %v924 = vmul.f32 %v721, 1.442695
        %v925 = vpow.pop %v924
        %v926 = vmul.f32 %v722, 1.442695
        %v927 = vpow.pop %v926
        %v928 = vmul.f32 %v723, 1.442695
        %v929 = vpow.pop %v928
        %v930 = vmul.f32 %v724, 1.442695
        %v931 = vpow.pop %v930
        %v932 = vmul.f32 %v725, 1.442695
        %v933 = vpow.pop %v932
        %v934 = vmul.f32 %v726, 1.442695
        %v935 = vpow.pop %v934
        %v936 = vmul.f32 %v727, 1.442695
        %v937 = vpow.pop %v936
        %v938 = vmul.f32 %v728, 1.442695
        %v939 = vpow.pop %v938
        %v940 = vmul.f32 %v729, 1.442695
        %v941 = vpow.pop %v940
        %v942 = vmul.f32 %v730, 1.442695
        %v943 = vpow.pop %v942
        %v944 = vmul.f32 %v731, 1.442695
        %v945 = vpow.pop %v944
        %v946 = vsel %vm850, %v883, 0.0
        %v947 = vsel %vm851, %v885, 0.0
        %v948 = vsel %vm852, %v887, 0.0
        %v949 = vsel %vm853, %v889, 0.0
        %v950 = vsel %vm854, %v891, 0.0
        %v951 = vsel %vm855, %v893, 0.0
        %v952 = vsel %vm856, %v895, 0.0
        %v953 = vsel %vm857, %v897, 0.0
        %v954 = vsel %vm858, %v899, 0.0
        %v955 = vsel %vm859, %v901, 0.0
        %v956 = vsel %vm860, %v903, 0.0
        %v957 = vsel %vm861, %v905, 0.0
        %v958 = vsel %vm862, %v907, 0.0
        %v959 = vsel %vm863, %v909, 0.0
        %v960 = vsel %vm864, %v911, 0.0
        %v961 = vsel %vm865, %v913, 0.0
        %v962 = vsel %vm866, %v915, 0.0
        %v963 = vsel %vm867, %v917, 0.0
        %v964 = vsel %vm868, %v919, 0.0
        %v965 = vsel %vm869, %v921, 0.0
        %v966 = vsel %vm870, %v923, 0.0
        %v967 = vsel %vm871, %v925, 0.0
        %v968 = vsel %vm872, %v927, 0.0
        %v969 = vsel %vm873, %v929, 0.0
        %v970 = vsel %vm874, %v931, 0.0
        %v971 = vsel %vm875, %v933, 0.0
        %v972 = vsel %vm876, %v935, 0.0
        %v973 = vsel %vm877, %v937, 0.0
        %v974 = vsel %vm878, %v939, 0.0
        %v975 = vsel %vm879, %v941, 0.0
        %v976 = vsel %vm880, %v943, 0.0
        %v977 = vsel %vm881, %v945, 0.0
        %v978 = vadd.f32 %v946, %v947
        %v979 = vadd.f32 %v948, %v949
        %v980 = vadd.f32 %v950, %v951
        %v981 = vadd.f32 %v952, %v953
        %v982 = vadd.f32 %v954, %v955
        %v983 = vadd.f32 %v956, %v957
        %v984 = vadd.f32 %v958, %v959
        %v985 = vadd.f32 %v960, %v961
        %v986 = vadd.f32 %v962, %v963
        %v987 = vadd.f32 %v964, %v965
        %v988 = vadd.f32 %v966, %v967
        %v989 = vadd.f32 %v968, %v969
        %v990 = vadd.f32 %v970, %v971
        %v991 = vadd.f32 %v972, %v973
        %v992 = vadd.f32 %v974, %v975
        %v993 = vadd.f32 %v976, %v977
        %v994 = vld [vmem:[#allocation2] sm:$0xff]
        %v995 = vld [vmem:[#allocation2 + $0x8] sm:$0xff]
        %v996 = vld [vmem:[#allocation2 + $0x10] sm:$0xff]
        %v997 = vld [vmem:[#allocation2 + $0x18] sm:$0xff]
        %v998 = vld [vmem:[#allocation2 + $0x20] sm:$0xff]
        %v999 = vld [vmem:[#allocation2 + $0x28] sm:$0xff]
        %v1000 = vld [vmem:[#allocation2 + $0x30] sm:$0xff]
        %v1001 = vld [vmem:[#allocation2 + $0x38] sm:$0xff]
        %v1002 = vld [vmem:[#allocation2 + $0x40] sm:$0xff]
        %v1003 = vld [vmem:[#allocation2 + $0x48] sm:$0xff]
        %v1004 = vld [vmem:[#allocation2 + $0x50] sm:$0xff]
        %v1005 = vld [vmem:[#allocation2 + $0x58] sm:$0xff]
        %v1006 = vld [vmem:[#allocation2 + $0x60] sm:$0xff]
        %v1007 = vld [vmem:[#allocation2 + $0x68] sm:$0xff]
        %v1008 = vld [vmem:[#allocation2 + $0x70] sm:$0xff]
        %v1009 = vld [vmem:[#allocation2 + $0x78] sm:$0xff]
        %v1010 = vadd.f32 %v994, %v978
        %v1011 = vadd.f32 %v995, %v979
        %v1012 = vadd.f32 %v996, %v980
        %v1013 = vadd.f32 %v997, %v981
        %v1014 = vadd.f32 %v998, %v982
        %v1015 = vadd.f32 %v999, %v983
        %v1016 = vadd.f32 %v1000, %v984
        %v1017 = vadd.f32 %v1001, %v985
        %v1018 = vadd.f32 %v1002, %v986
        %v1019 = vadd.f32 %v1003, %v987
        %v1020 = vadd.f32 %v1004, %v988
        %v1021 = vadd.f32 %v1005, %v989
        %v1022 = vadd.f32 %v1006, %v990
        %v1023 = vadd.f32 %v1007, %v991
        %v1024 = vadd.f32 %v1008, %v992
        %v1025 = vadd.f32 %v1009, %v993
        %1026 = vst [vmem:[#allocation2] sm:$0xff] %v1010
        %1027 = vst [vmem:[#allocation2 + $0x8] sm:$0xff] %v1011
        %1028 = vst [vmem:[#allocation2 + $0x10] sm:$0xff] %v1012
        %1029 = vst [vmem:[#allocation2 + $0x18] sm:$0xff] %v1013
        %1030 = vst [vmem:[#allocation2 + $0x20] sm:$0xff] %v1014
        %1031 = vst [vmem:[#allocation2 + $0x28] sm:$0xff] %v1015
        %1032 = vst [vmem:[#allocation2 + $0x30] sm:$0xff] %v1016
        %1033 = vst [vmem:[#allocation2 + $0x38] sm:$0xff] %v1017
        %1034 = vst [vmem:[#allocation2 + $0x40] sm:$0xff] %v1018
        %1035 = vst [vmem:[#allocation2 + $0x48] sm:$0xff] %v1019
        %1036 = vst [vmem:[#allocation2 + $0x50] sm:$0xff] %v1020
        %1037 = vst [vmem:[#allocation2 + $0x58] sm:$0xff] %v1021
        %1038 = vst [vmem:[#allocation2 + $0x60] sm:$0xff] %v1022
        %1039 = vst [vmem:[#allocation2 + $0x68] sm:$0xff] %v1023
        %1040 = vst [vmem:[#allocation2 + $0x70] sm:$0xff] %v1024
        %1041 = vst [vmem:[#allocation2 + $0x78] sm:$0xff] %v1025
        // Predicated region
        $region57: #{tpu_custom_call.1} parent=43 // pred_check
          %p1042 = pneg %p494
        $region58: #{tpu_custom_call.1} parent=43 // pred_check_branch
          %1044 = sbr.rel (%p1042) target = $region60
        $region59: #{tpu_custom_call.1} parent=43 // pred_region
          %v1045 = vld [vmem:[#allocation2] sm:$0xff]
          %v1046 = vld [vmem:[#allocation2 + $0x8] sm:$0xff]
          %v1047 = vld [vmem:[#allocation2 + $0x10] sm:$0xff]
          %v1048 = vld [vmem:[#allocation2 + $0x18] sm:$0xff]
          %v1049 = vld [vmem:[#allocation2 + $0x20] sm:$0xff]
          %v1050 = vld [vmem:[#allocation2 + $0x28] sm:$0xff]
          %v1051 = vld [vmem:[#allocation2 + $0x30] sm:$0xff]
          %v1052 = vld [vmem:[#allocation2 + $0x38] sm:$0xff]
          %v1053 = vld [vmem:[#allocation2 + $0x40] sm:$0xff]
          %v1054 = vld [vmem:[#allocation2 + $0x48] sm:$0xff]
          %v1055 = vld [vmem:[#allocation2 + $0x50] sm:$0xff]
          %v1056 = vld [vmem:[#allocation2 + $0x58] sm:$0xff]
          %v1057 = vld [vmem:[#allocation2 + $0x60] sm:$0xff]
          %v1058 = vld [vmem:[#allocation2 + $0x68] sm:$0xff]
          %v1059 = vld [vmem:[#allocation2 + $0x70] sm:$0xff]
          %v1060 = vld [vmem:[#allocation2 + $0x78] sm:$0xff]
          %1061 = vadd.xlane.f32.xlu0 %v1045
          %v1062 = vpop.xlane.xlu0 %1061
          %1063 = vadd.xlane.f32.xlu0 %v1046
          %v1064 = vpop.xlane.xlu0 %1063
          %1065 = vadd.xlane.f32.xlu0 %v1047
          %v1066 = vpop.xlane.xlu0 %1065
          %1067 = vadd.xlane.f32.xlu0 %v1048
          %v1068 = vpop.xlane.xlu0 %1067
          %1069 = vadd.xlane.f32.xlu0 %v1049
          %v1070 = vpop.xlane.xlu0 %1069
          %1071 = vadd.xlane.f32.xlu0 %v1050
          %v1072 = vpop.xlane.xlu0 %1071
          %1073 = vadd.xlane.f32.xlu0 %v1051
          %v1074 = vpop.xlane.xlu0 %1073
          %1075 = vadd.xlane.f32.xlu0 %v1052
          %v1076 = vpop.xlane.xlu0 %1075
          %1077 = vadd.xlane.f32.xlu0 %v1053
          %v1078 = vpop.xlane.xlu0 %1077
          %1079 = vadd.xlane.f32.xlu0 %v1054
          %v1080 = vpop.xlane.xlu0 %1079
          %1081 = vadd.xlane.f32.xlu0 %v1055
          %v1082 = vpop.xlane.xlu0 %1081
          %1083 = vadd.xlane.f32.xlu0 %v1056
          %v1084 = vpop.xlane.xlu0 %1083
          %1085 = vadd.xlane.f32.xlu0 %v1057
          %v1086 = vpop.xlane.xlu0 %1085
          %1087 = vadd.xlane.f32.xlu0 %v1058
          %v1088 = vpop.xlane.xlu0 %1087
          %1089 = vadd.xlane.f32.xlu0 %v1059
          %v1090 = vpop.xlane.xlu0 %1089
          %1091 = vadd.xlane.f32.xlu0 %v1060
          %v1092 = vpop.xlane.xlu0 %1091
          %v1093 = vld [vmem:[%s369] sm:$0xff]
          %v1094 = vld [vmem:[%s369 + $0x8] sm:$0xff]
          %v1095 = vld [vmem:[%s369 + $0x10] sm:$0xff]
          %v1096 = vld [vmem:[%s369 + $0x18] sm:$0xff]
          %v1097 = vld [vmem:[%s369 + $0x20] sm:$0xff]
          %v1098 = vld [vmem:[%s369 + $0x28] sm:$0xff]
          %v1099 = vld [vmem:[%s369 + $0x30] sm:$0xff]
          %v1100 = vld [vmem:[%s369 + $0x38] sm:$0xff]
          %v1101 = vld [vmem:[%s369 + $0x40] sm:$0xff]
          %v1102 = vld [vmem:[%s369 + $0x48] sm:$0xff]
          %v1103 = vld [vmem:[%s369 + $0x50] sm:$0xff]
          %v1104 = vld [vmem:[%s369 + $0x58] sm:$0xff]
          %v1105 = vld [vmem:[%s369 + $0x60] sm:$0xff]
          %v1106 = vld [vmem:[%s369 + $0x68] sm:$0xff]
          %v1107 = vld [vmem:[%s369 + $0x70] sm:$0xff]
          %v1108 = vld [vmem:[%s369 + $0x78] sm:$0xff]
          %v1109 = vmul.f32 %v514, %v1093
          %v1110 = vmul.f32 %v515, %v1094
          %v1111 = vmul.f32 %v516, %v1095
          %v1112 = vmul.f32 %v517, %v1096
          %v1113 = vmul.f32 %v518, %v1097
          %v1114 = vmul.f32 %v519, %v1098
          %v1115 = vmul.f32 %v520, %v1099
          %v1116 = vmul.f32 %v521, %v1100
          %v1117 = vmul.f32 %v522, %v1101
          %v1118 = vmul.f32 %v523, %v1102
          %v1119 = vmul.f32 %v524, %v1103
          %v1120 = vmul.f32 %v525, %v1104
          %v1121 = vmul.f32 %v526, %v1105
          %v1122 = vmul.f32 %v527, %v1106
          %v1123 = vmul.f32 %v528, %v1107
          %v1124 = vmul.f32 %v529, %v1108
          %1125 = vadd.xlane.f32.xlu0 %v1109
          %v1126 = vpop.xlane.xlu0 %1125
          %1127 = vadd.xlane.f32.xlu0 %v1110
          %v1128 = vpop.xlane.xlu0 %1127
          %1129 = vadd.xlane.f32.xlu0 %v1111
          %v1130 = vpop.xlane.xlu0 %1129
          %1131 = vadd.xlane.f32.xlu0 %v1112
          %v1132 = vpop.xlane.xlu0 %1131
          %1133 = vadd.xlane.f32.xlu0 %v1113
          %v1134 = vpop.xlane.xlu0 %1133
          %1135 = vadd.xlane.f32.xlu0 %v1114
          %v1136 = vpop.xlane.xlu0 %1135
          %1137 = vadd.xlane.f32.xlu0 %v1115
          %v1138 = vpop.xlane.xlu0 %1137
          %1139 = vadd.xlane.f32.xlu0 %v1116
          %v1140 = vpop.xlane.xlu0 %1139
          %1141 = vadd.xlane.f32.xlu0 %v1117
          %v1142 = vpop.xlane.xlu0 %1141
          %1143 = vadd.xlane.f32.xlu0 %v1118
          %v1144 = vpop.xlane.xlu0 %1143
          %1145 = vadd.xlane.f32.xlu0 %v1119
          %v1146 = vpop.xlane.xlu0 %1145
          %1147 = vadd.xlane.f32.xlu0 %v1120
          %v1148 = vpop.xlane.xlu0 %1147
          %1149 = vadd.xlane.f32.xlu0 %v1121
          %v1150 = vpop.xlane.xlu0 %1149
          %1151 = vadd.xlane.f32.xlu0 %v1122
          %v1152 = vpop.xlane.xlu0 %1151
          %1153 = vadd.xlane.f32.xlu0 %v1123
          %v1154 = vpop.xlane.xlu0 %1153
          %1155 = vadd.xlane.f32.xlu0 %v1124
          %v1156 = vpop.xlane.xlu0 %1155
          %v1157 = vrcp.pop 50.0
          %v1158 = vmul.f32 %v1126, %v1157
          %v1159 = vmul.f32 %v1128, %v1157
          %v1160 = vmul.f32 %v1130, %v1157
          %v1161 = vmul.f32 %v1132, %v1157
          %v1162 = vmul.f32 %v1134, %v1157
          %v1163 = vmul.f32 %v1136, %v1157
          %v1164 = vmul.f32 %v1138, %v1157
          %v1165 = vmul.f32 %v1140, %v1157
          %v1166 = vmul.f32 %v1142, %v1157
          %v1167 = vmul.f32 %v1144, %v1157
          %v1168 = vmul.f32 %v1146, %v1157
          %v1169 = vmul.f32 %v1148, %v1157
          %v1170 = vmul.f32 %v1150, %v1157
          %v1171 = vmul.f32 %v1152, %v1157
          %v1172 = vmul.f32 %v1154, %v1157
          %v1173 = vmul.f32 %v1156, %v1157
          %v1174 = vmul.f32 %v1158, 1.442695
          %v1175 = vpow.pop %v1174
          %v1176 = vmul.f32 %v1159, 1.442695
          %v1177 = vpow.pop %v1176
          %v1178 = vmul.f32 %v1160, 1.442695
          %v1179 = vpow.pop %v1178
          %v1180 = vmul.f32 %v1161, 1.442695
          %v1181 = vpow.pop %v1180
          %v1182 = vmul.f32 %v1162, 1.442695
          %v1183 = vpow.pop %v1182
          %v1184 = vmul.f32 %v1163, 1.442695
          %v1185 = vpow.pop %v1184
          %v1186 = vmul.f32 %v1164, 1.442695
          %v1187 = vpow.pop %v1186
          %v1188 = vmul.f32 %v1165, 1.442695
          %v1189 = vpow.pop %v1188
          %v1190 = vmul.f32 %v1166, 1.442695
          %v1191 = vpow.pop %v1190
          %v1192 = vmul.f32 %v1167, 1.442695
          %v1193 = vpow.pop %v1192
          %v1194 = vmul.f32 %v1168, 1.442695
          %v1195 = vpow.pop %v1194
          %v1196 = vmul.f32 %v1169, 1.442695
          %v1197 = vpow.pop %v1196
          %v1198 = vmul.f32 %v1170, 1.442695
          %v1199 = vpow.pop %v1198
          %v1200 = vmul.f32 %v1171, 1.442695
          %v1201 = vpow.pop %v1200
          %v1202 = vmul.f32 %v1172, 1.442695
          %v1203 = vpow.pop %v1202
          %v1204 = vmul.f32 %v1173, 1.442695
          %v1205 = vpow.pop %v1204
          %v1206 = vadd.f32 %v1175, %v1062
          %v1207 = vadd.f32 %v1177, %v1064
          %v1208 = vadd.f32 %v1179, %v1066
          %v1209 = vadd.f32 %v1181, %v1068
          %v1210 = vadd.f32 %v1183, %v1070
          %v1211 = vadd.f32 %v1185, %v1072
          %v1212 = vadd.f32 %v1187, %v1074
          %v1213 = vadd.f32 %v1189, %v1076
          %v1214 = vadd.f32 %v1191, %v1078
          %v1215 = vadd.f32 %v1193, %v1080
          %v1216 = vadd.f32 %v1195, %v1082
          %v1217 = vadd.f32 %v1197, %v1084
          %v1218 = vadd.f32 %v1199, %v1086
          %v1219 = vadd.f32 %v1201, %v1088
          %v1220 = vadd.f32 %v1203, %v1090
          %v1221 = vadd.f32 %v1205, %v1092
          %v1222 = vadd.f32 %v1206, 1e-08
          %v1223 = vadd.f32 %v1207, 1e-08
          %v1224 = vadd.f32 %v1208, 1e-08
          %v1225 = vadd.f32 %v1209, 1e-08
          %v1226 = vadd.f32 %v1210, 1e-08
          %v1227 = vadd.f32 %v1211, 1e-08
          %v1228 = vadd.f32 %v1212, 1e-08
          %v1229 = vadd.f32 %v1213, 1e-08
          %v1230 = vadd.f32 %v1214, 1e-08
          %v1231 = vadd.f32 %v1215, 1e-08
          %v1232 = vadd.f32 %v1216, 1e-08
          %v1233 = vadd.f32 %v1217, 1e-08
          %v1234 = vadd.f32 %v1218, 1e-08
          %v1235 = vadd.f32 %v1219, 1e-08
          %v1236 = vadd.f32 %v1220, 1e-08
          %v1237 = vadd.f32 %v1221, 1e-08
          %v1238 = vrcp.pop %v1222
          %v1239 = vmul.f32 %v1175, %v1238
          %v1240 = vrcp.pop %v1223
          %v1241 = vmul.f32 %v1177, %v1240
          %v1242 = vrcp.pop %v1224
          %v1243 = vmul.f32 %v1179, %v1242
          %v1244 = vrcp.pop %v1225
          %v1245 = vmul.f32 %v1181, %v1244
          %v1246 = vrcp.pop %v1226
          %v1247 = vmul.f32 %v1183, %v1246
          %v1248 = vrcp.pop %v1227
          %v1249 = vmul.f32 %v1185, %v1248
          %v1250 = vrcp.pop %v1228
          %v1251 = vmul.f32 %v1187, %v1250
          %v1252 = vrcp.pop %v1229
          %v1253 = vmul.f32 %v1189, %v1252
          %v1254 = vrcp.pop %v1230
          %v1255 = vmul.f32 %v1191, %v1254
          %v1256 = vrcp.pop %v1231
          %v1257 = vmul.f32 %v1193, %v1256
          %v1258 = vrcp.pop %v1232
          %v1259 = vmul.f32 %v1195, %v1258
          %v1260 = vrcp.pop %v1233
          %v1261 = vmul.f32 %v1197, %v1260
          %v1262 = vrcp.pop %v1234
          %v1263 = vmul.f32 %v1199, %v1262
          %v1264 = vrcp.pop %v1235
          %v1265 = vmul.f32 %v1201, %v1264
          %v1266 = vrcp.pop %v1236
          %v1267 = vmul.f32 %v1203, %v1266
          %v1268 = vrcp.pop %v1237
          %v1269 = vmul.f32 %v1205, %v1268
          %v1270 = vadd.f32 %v1239, 1e-08
          %v1271 = vadd.f32 %v1241, 1e-08
          %v1272 = vadd.f32 %v1243, 1e-08
          %v1273 = vadd.f32 %v1245, 1e-08
          %v1274 = vadd.f32 %v1247, 1e-08
          %v1275 = vadd.f32 %v1249, 1e-08
          %v1276 = vadd.f32 %v1251, 1e-08
          %v1277 = vadd.f32 %v1253, 1e-08
          %v1278 = vadd.f32 %v1255, 1e-08
          %v1279 = vadd.f32 %v1257, 1e-08
          %v1280 = vadd.f32 %v1259, 1e-08
          %v1281 = vadd.f32 %v1261, 1e-08
          %v1282 = vadd.f32 %v1263, 1e-08
          %v1283 = vadd.f32 %v1265, 1e-08
          %v1284 = vadd.f32 %v1267, 1e-08
          %v1285 = vadd.f32 %v1269, 1e-08
          %v1286 = vlog2.pop %v1270
          %v1287 = vmul.f32 %v1286, 0.6931472
          %v1288 = vlog2.pop %v1271
          %v1289 = vmul.f32 %v1288, 0.6931472
          %v1290 = vlog2.pop %v1272
          %v1291 = vmul.f32 %v1290, 0.6931472
          %v1292 = vlog2.pop %v1273
          %v1293 = vmul.f32 %v1292, 0.6931472
          %v1294 = vlog2.pop %v1274
          %v1295 = vmul.f32 %v1294, 0.6931472
          %v1296 = vlog2.pop %v1275
          %v1297 = vmul.f32 %v1296, 0.6931472
          %v1298 = vlog2.pop %v1276
          %v1299 = vmul.f32 %v1298, 0.6931472
          %v1300 = vlog2.pop %v1277
          %v1301 = vmul.f32 %v1300, 0.6931472
          %v1302 = vlog2.pop %v1278
          %v1303 = vmul.f32 %v1302, 0.6931472
          %v1304 = vlog2.pop %v1279
          %v1305 = vmul.f32 %v1304, 0.6931472
          %v1306 = vlog2.pop %v1280
          %v1307 = vmul.f32 %v1306, 0.6931472
          %v1308 = vlog2.pop %v1281
          %v1309 = vmul.f32 %v1308, 0.6931472
          %v1310 = vlog2.pop %v1282
          %v1311 = vmul.f32 %v1310, 0.6931472
          %v1312 = vlog2.pop %v1283
          %v1313 = vmul.f32 %v1312, 0.6931472
          %v1314 = vlog2.pop %v1284
          %v1315 = vmul.f32 %v1314, 0.6931472
          %v1316 = vlog2.pop %v1285
          %v1317 = vmul.f32 %v1316, 0.6931472
          %v1318 = vsub.f32 0.0, %v1287
          %v1319 = vsub.f32 0.0, %v1289
          %v1320 = vsub.f32 0.0, %v1291
          %v1321 = vsub.f32 0.0, %v1293
          %v1322 = vsub.f32 0.0, %v1295
          %v1323 = vsub.f32 0.0, %v1297
          %v1324 = vsub.f32 0.0, %v1299
          %v1325 = vsub.f32 0.0, %v1301
          %v1326 = vsub.f32 0.0, %v1303
          %v1327 = vsub.f32 0.0, %v1305
          %v1328 = vsub.f32 0.0, %v1307
          %v1329 = vsub.f32 0.0, %v1309
          %v1330 = vsub.f32 0.0, %v1311
          %v1331 = vsub.f32 0.0, %v1313
          %v1332 = vsub.f32 0.0, %v1315
          %v1333 = vsub.f32 0.0, %v1317
          %v1334 = vld [vmem:[%s481] sm:$0xff]
          %v1335 = vld [vmem:[%s481 + $0x8] sm:$0xff]
          %v1336 = vld [vmem:[%s481 + $0x10] sm:$0xff]
          %v1337 = vld [vmem:[%s481 + $0x18] sm:$0xff]
          %v1338 = vld [vmem:[%s481 + $0x20] sm:$0xff]
          %v1339 = vld [vmem:[%s481 + $0x28] sm:$0xff]
          %v1340 = vld [vmem:[%s481 + $0x30] sm:$0xff]
          %v1341 = vld [vmem:[%s481 + $0x38] sm:$0xff]
          %v1342 = vld [vmem:[%s481 + $0x40] sm:$0xff]
          %v1343 = vld [vmem:[%s481 + $0x48] sm:$0xff]
          %v1344 = vld [vmem:[%s481 + $0x50] sm:$0xff]
          %v1345 = vld [vmem:[%s481 + $0x58] sm:$0xff]
          %v1346 = vld [vmem:[%s481 + $0x60] sm:$0xff]
          %v1347 = vld [vmem:[%s481 + $0x68] sm:$0xff]
          %v1348 = vld [vmem:[%s481 + $0x70] sm:$0xff]
          %v1349 = vld [vmem:[%s481 + $0x78] sm:$0xff]
          %v1350 = vmul.f32 %v1334, %v1318
          %v1351 = vmul.f32 %v1335, %v1319
          %v1352 = vmul.f32 %v1336, %v1320
          %v1353 = vmul.f32 %v1337, %v1321
          %v1354 = vmul.f32 %v1338, %v1322
          %v1355 = vmul.f32 %v1339, %v1323
          %v1356 = vmul.f32 %v1340, %v1324
          %v1357 = vmul.f32 %v1341, %v1325
          %v1358 = vmul.f32 %v1342, %v1326
          %v1359 = vmul.f32 %v1343, %v1327
          %v1360 = vmul.f32 %v1344, %v1328
          %v1361 = vmul.f32 %v1345, %v1329
          %v1362 = vmul.f32 %v1346, %v1330
          %v1363 = vmul.f32 %v1347, %v1331
          %v1364 = vmul.f32 %v1348, %v1332
          %v1365 = vmul.f32 %v1349, %v1333
          %vm1366 = vcmask 7168
          %1367 = vst.msk [vmem:[%s491] sm:$0xff] %vm1366, %v1350
          %1368 = vst.msk [vmem:[%s491 + $0x8] sm:$0xff] %vm1366, %v1351
          %1369 = vst.msk [vmem:[%s491 + $0x10] sm:$0xff] %vm1366, %v1352
          %1370 = vst.msk [vmem:[%s491 + $0x18] sm:$0xff] %vm1366, %v1353
          %1371 = vst.msk [vmem:[%s491 + $0x20] sm:$0xff] %vm1366, %v1354
          %1372 = vst.msk [vmem:[%s491 + $0x28] sm:$0xff] %vm1366, %v1355
          %1373 = vst.msk [vmem:[%s491 + $0x30] sm:$0xff] %vm1366, %v1356
          %1374 = vst.msk [vmem:[%s491 + $0x38] sm:$0xff] %vm1366, %v1357
          %1375 = vst.msk [vmem:[%s491 + $0x40] sm:$0xff] %vm1366, %v1358
          %1376 = vst.msk [vmem:[%s491 + $0x48] sm:$0xff] %vm1366, %v1359
          %1377 = vst.msk [vmem:[%s491 + $0x50] sm:$0xff] %vm1366, %v1360
          %1378 = vst.msk [vmem:[%s491 + $0x58] sm:$0xff] %vm1366, %v1361
          %1379 = vst.msk [vmem:[%s491 + $0x60] sm:$0xff] %vm1366, %v1362
          %1380 = vst.msk [vmem:[%s491 + $0x68] sm:$0xff] %vm1366, %v1363
          %1381 = vst.msk [vmem:[%s491 + $0x70] sm:$0xff] %vm1366, %v1364
          %1382 = vst.msk [vmem:[%s491 + $0x78] sm:$0xff] %vm1366, %v1365
        $region60: #{tpu_custom_call.1} parent=43 // pred_fallthru
          _
        %s1383 = smul.u32 16, %s29
        %p1384 = scmp.lt.s32.totalorder %s28, 1
        %s1385 = scalar_select %p1384, %s28, 1
        %p1386 = scmp.lt.s32.totalorder %s1383, 15
        %s1387 = scalar_select %p1386, %s1383, 15
        %s1388 = smul.addr %s1385, 16
        %s1389 = sadd.s32 %s1387, %s1388
        %s1390 = smul.addr %s1389, 8
        %s1391 = scalar_lea.vmem %s6, %s1390
        // Predicated region
        $region61: #{tpu_custom_call.1} parent=43 // pred_check
          %p1392 = pneg %p230
        $region62: #{tpu_custom_call.1} parent=43 // pred_check_branch
          %1394 = sbr.rel (%p1392) target = $region64
        $region63: #{tpu_custom_call.1} parent=43 // pred_region
          %s1395 = smul.u32 16, %s29
        $region64: #{tpu_custom_call.1} parent=43 // pred_fallthru
          _
      $region44: #{tpu_custom_call.1} parent=5 // pred_fallthru
        _
      %p1396 = scmp.le.s32.totalorder 2, %s18
      // Predicated region
      $region65: #{tpu_custom_call.1} parent=5 // pred_check
        %p1397 = pneg %p1396
      $region66: #{tpu_custom_call.1} parent=5 // pred_check_branch
        %1399 = sbr.rel (%p1397) target = $region68
      $region67: #{tpu_custom_call.1} parent=5 // pred_region
        %s1400 = ssub.s32 %s18, 2
        // Predicated region
        $region69: #{tpu_custom_call.1} parent=67 // pred_check
          %p1401 = pneg %p236
        $region70: #{tpu_custom_call.1} parent=67 // pred_check_branch
          %1403 = sbr.rel (%p1401) target = $region72
        $region71: #{tpu_custom_call.1} parent=67 // pred_region
          %s1404 = smul.u32 16, %s32
          %p1405 = scmp.lt.s32.totalorder %s31, 1
          %s1406 = scalar_select %p1405, %s31, 1
          %p1407 = scmp.lt.s32.totalorder %s1404, 15
          %s1408 = scalar_select %p1407, %s1404, 15
          %s1409 = smul.addr %s1406, 16
          %s1410 = sadd.s32 %s1408, %s1409
          %s1411 = smul.addr %s1410, 8
          %s1412 = scalar_lea.vmem %s6, %s1411
        $region72: #{tpu_custom_call.1} parent=67 // pred_fallthru
          _
      $region68: #{tpu_custom_call.1} parent=5 // pred_fallthru
        _
    $region6: #{tpu_custom_call.1} parent=1 // loop_footer
      %s22 = sadd.s32 1, %s18
    $region7: #{tpu_custom_call.1} parent=1 // loop_footer_branch
      %17 = sbr.rel target = $region3
    $region8: #{tpu_custom_call.1} parent=1 // loop_exit
      _
    %1413 = vsyncpa [#allocation4], 1
    %s1414 = scalar_lea.sflag [#allocation4], 1
    %1415 = vsyncpa %s1414, 1
    %1416 = vsyncpa [#allocation6], 1
    %s1417 = scalar_lea.sflag [#allocation6], 1
    %1418 = vsyncpa %s1417, 1

</llo_original>
